<compile_context>
chip_gen: v7x
topology: tpu7x:2x2x1
jax: 0.10.0
libtpu: 0.0.40
codegen_flags: <defaults>
</compile_context>

<pallas_src>
import functools

import jax
import jax.numpy as jnp
from jax.experimental import pallas as pl
from jax.experimental.pallas import tpu as pltpu

BN_EPS = 1e-5
LANE = 128


# ---------------------------------------------------------------------------
# Fused Pallas kernel: whole TCN forward for one batch element per grid step.
# ---------------------------------------------------------------------------
def _fused_tcn_kernel(*refs, layer_cfgs, kmax, t_len, t_pad, pad_max):
    """refs = (x_ref, *weight_refs, o_ref, xpad_ref).

    x_ref:    (1, T, C_in0)   input block in natural (time, feature) layout
    weights:  per layer [w0 (m0, kmax*c_in) bf16, b0 (m0, 1) f32,
                         w1 (c_out, kmax*c_out) bf16, b1 (c_out, 1) f32]
              where m0 = 2*c_out when the block has a downsample (its 1x1 conv is
              folded in as extra rows, non-zero only at the zero-shift tap), else c_out.
              BatchNorm already folded; branches fused and im2col-reshaped at init.
    o_ref:    (1, C_out_last, T_pad)  lane-dense output block
    xpad_ref: (c_max, pad_max + T_pad) VMEM staging scratch; columns [0, pad_max) hold
              the causal zero prefix and are never written by any sub-layer.
    """
    x_ref, o_ref, xpad_ref = refs[0], refs[-2], refs[-1]
    w_refs = refs[1:-2]

    # Causal zero prefix: tiny (c_max, pad_max) store per step.  Do NOT guard with
    # pl.when(program_id == 0): under "parallel" semantics each core gets its own
    # scratch, so a first-iteration-only init is unsafe on megacore parts (v7x).
    if pad_max > 0:
        xpad_ref[:, 0:pad_max] = jnp.zeros((xpad_ref.shape[0], pad_max),
                                           xpad_ref.dtype)

    def im2col(c_rows, dil):
        # Concatenate the kmax causally shifted windows of the staged activation into
        # the (kmax*c_rows, t_pad) RHS of a single deep-contraction bf16 matmul.
        windows = []
        for j in range(kmax):
            start = pad_max - (kmax - 1 - j) * dil   # tap j reads x[t - (kmax-1-j)*dil]
            windows.append(xpad_ref[0:c_rows, start:start + t_pad])
        return jnp.concatenate(windows, axis=0).astype(jnp.bfloat16)

    # First-layer input: (T, C) -> (C, T) on the XLU, zero-pad lanes out to t_pad.
    xt = jnp.transpose(x_ref[0].astype(jnp.float32), (1, 0))        # (c_in0, T)
    if t_pad > t_len:
        xt = jnp.concatenate(
            [xt, jnp.zeros((xt.shape[0], t_pad - t_len), jnp.float32)], axis=1)
    h = xt                                                            # (c_in0, t_pad)

    wi = 0
    for cfg in layer_cfgs:
        dil = cfg['dilation']
        has_ds = cfg['has_downsample']
        w0, b0, w1, b1 = w_refs[wi], w_refs[wi + 1], w_refs[wi + 2], w_refs[wi + 3]
        wi += 4
        c_in = h.shape[0]
        n_out = w1.shape[0]

        # ---- sub-layer 0: fused branches (+ folded downsample rows) --------------
        xpad_ref[0:c_in, pad_max:] = h
        pre = jnp.dot(w0[...], im2col(c_in, dil),
                      preferred_element_type=jnp.float32) + b0[...]
        h1 = jnp.maximum(pre[0:n_out], 0.0)              # conv + BN + chomp + ReLU
        res = pre[n_out:] if has_ds else h               # residual path (no ReLU)
        # dropout: identity (eval mode)

        # ---- sub-layer 1 ----------------------------------------------------------
        xpad_ref[0:n_out, pad_max:] = h1
        h2 = jnp.maximum(jnp.dot(w1[...], im2col(n_out, dil),
                                 preferred_element_type=jnp.float32) + b1[...], 0.0)

        h = jnp.maximum(h2 + res, 0.0)                   # block-output ReLU

    o_ref[0] = h.astype(o_ref.dtype)


def _broadcast_map(nd):
    return lambda b: (0,) * nd


def _tcn_forward(flat_weights, x, *, layer_cfgs, kmax, c_in0, c_out, c_max, pad_max):
    """x: (B, T, C_in0) -> (B, c_out, T); the whole net in one fused pallas_call."""
    B, T, _ = x.shape
    t_pad = pl.cdiv(T, LANE) * LANE          # lane-dense internal / output width

    kern = functools.partial(_fused_tcn_kernel, layer_cfgs=layer_cfgs, kmax=kmax,
                             t_len=T, t_pad=t_pad, pad_max=pad_max)

    in_specs = [pl.BlockSpec((1, T, c_in0), lambda b: (b, 0, 0))]
    for w in flat_weights:
        # Weights are grid-resident (constant index_map).
        in_specs.append(pl.BlockSpec(w.shape, _broadcast_map(w.ndim)))

    out = pl.pallas_call(
        kern,
        out_shape=jax.ShapeDtypeStruct((B, c_out, t_pad), jnp.float32),
        grid=(B,),
        in_specs=in_specs,
        out_specs=pl.BlockSpec((1, c_out, t_pad), lambda b: (b, 0, 0)),
        scratch_shapes=[pltpu.VMEM((c_max, pad_max + t_pad), jnp.float32)],
        compiler_params=pltpu.CompilerParams(
            dimension_semantics=("parallel",),        # B>=2 keeps both v7x cores busy
            vmem_limit_bytes=32 * 1024 * 1024),       # above v5e's 16 MiB default
    )(x, *flat_weights)
    # Drop the lane-padding tail; causality keeps columns [0, T) exact.
    return out[:, :, :T]


# ---------------------------------------------------------------------------
# Parameter init: deterministic, mirrors the PyTorch module.  BN folded, branches
# fused, weights im2col-reshaped and bf16-cast, downsample folded — all ONCE here.
# ---------------------------------------------------------------------------
def _init_branch_conv(key, c_in, c_out, k):
    kw, kb = jax.random.split(key)
    bound = 1.0 / (c_in * k) ** 0.5
    w = jax.random.uniform(kw, (c_out, c_in, k), jnp.float32, -bound, bound)
    b = jax.random.uniform(kb, (c_out,), jnp.float32, -bound, bound)
    # BatchNorm1d fresh init (eval): gamma=1, beta=0, running mean=0, var=1.
    gamma = jnp.ones((c_out,), jnp.float32)
    beta = jnp.zeros((c_out,), jnp.float32)
    mean = jnp.zeros((c_out,), jnp.float32)
    var = jnp.ones((c_out,), jnp.float32)
    return w, b, gamma, beta, mean, var


def _fold_and_fuse_branches(keys, c_in, n_out, kernel_sizes, kmax):
    """One ConvBatchChompRelu sub-layer: fold eval BN into conv, zero-pad smaller
    kernel sizes to kmax taps (leading zeros keep causality), stack branches on the
    out-channel axis.  Returns w (kmax, n_out, c_in), b (n_out,)."""
    n_branch = n_out // len(kernel_sizes)
    w_parts, b_parts = [], []
    for key, k in zip(keys, kernel_sizes):
        w, b, gamma, beta, mean, var = _init_branch_conv(key, c_in, n_branch, k)
        scale = gamma / jnp.sqrt(var + BN_EPS)
        w = w * scale[:, None, None]                     # fold BN scale into weight
        bias = beta + (b - mean) * scale                 # fold conv bias through BN
        w = jnp.pad(w, ((0, 0), (0, 0), (kmax - k, 0)))  # leading zero taps
        w_parts.append(jnp.transpose(w, (2, 0, 1)))      # (kmax, n_branch, c_in)
        b_parts.append(bias)
    return jnp.concatenate(w_parts, axis=1), jnp.concatenate(b_parts, axis=0)


def _im2col_weight(w_taps):
    """(kmax, n_out, c_in) -> (n_out, kmax*c_in), matching the kernel's slab rows."""
    kmax_, n_out, c_in = w_taps.shape
    return jnp.transpose(w_taps, (1, 0, 2)).reshape(n_out, kmax_ * c_in)


def _init_layer(key, n_in, n_out, kernel_sizes, kmax):
    nk = len(kernel_sizes)
    keys = jax.random.split(key, 2 * nk + 1)
    w0, b0 = _fold_and_fuse_branches(list(keys[:nk]), n_in, n_out, kernel_sizes, kmax)
    w1, b1 = _fold_and_fuse_branches(list(keys[nk:2 * nk]), n_out, n_out,
                                     kernel_sizes, kmax)
    has_ds = n_in != n_out
    ref = {'w0': w0, 'b0': b0, 'w1': w1, 'b1': b1, 'wd': None, 'bd': None}

    w0_flat = _im2col_weight(w0)                         # (n_out, kmax*n_in)
    b0_col = b0.reshape(n_out, 1)
    if has_ds:                                           # 1x1 conv residual projection
        kw, kb = jax.random.split(keys[-1])
        bound = 1.0 / n_in ** 0.5
        wd = jax.random.uniform(kw, (n_out, n_in), jnp.float32, -bound, bound)
        bd = jax.random.uniform(kb, (n_out,), jnp.float32, -bound, bound)
        ref['wd'], ref['bd'] = wd, bd
        # Fold the downsample into sub-layer 0 as extra rows, non-zero only at the
        # zero-shift tap (j = kmax-1); its bias joins the sub-layer bias column.
        wd_taps = jnp.zeros((kmax, n_out, n_in), jnp.float32).at[kmax - 1].set(wd)
        w0_flat = jnp.concatenate([w0_flat, _im2col_weight(wd_taps)], axis=0)
        b0_col = jnp.concatenate([b0_col, bd.reshape(n_out, 1)], axis=0)

    kernel_flat = [w0_flat.astype(jnp.bfloat16), b0_col,
                   _im2col_weight(w1).astype(jnp.bfloat16), b1.reshape(n_out, 1)]
    return kernel_flat, ref, has_ds


# ---------------------------------------------------------------------------
# Module wrapper
# ---------------------------------------------------------------------------
class MultiscaleMultibranchTCNPallas:
    def __init__(self, key, input_size, num_channels, tcn_options, dropout,
                 relu_type, dwpw=False):
        assert not dwpw, "dwpw variant not implemented"  # TODO(synk): dw+pw branches
        assert relu_type == 'relu'                       # TODO(synk): PReLU not implemented
        self.kernel_sizes = list(tcn_options['kernel_size'])
        self.kmax = max(self.kernel_sizes)
        self.num_channels = list(num_channels)
        self.input_size = input_size

        keys = jax.random.split(key, len(num_channels))
        flat, refs, cfgs = [], [], []
        for i, n_out in enumerate(num_channels):
            n_in = input_size if i == 0 else num_channels[i - 1]
            layer_flat, lyr_ref, has_ds = _init_layer(keys[i], n_in, n_out,
                                                      self.kernel_sizes, self.kmax)
            flat += layer_flat
            refs.append(lyr_ref)
            cfgs.append({'dilation': 2 ** i, 'has_downsample': has_ds})
        self.flat_weights = tuple(flat)
        self.ref_layers = tuple(refs)
        self.layer_cfgs = tuple(cfgs)
        self.c_max = -(-max(input_size, *num_channels) // 8) * 8    # sublane-aligned
        self.pad_max = (self.kmax - 1) * (2 ** (len(num_channels) - 1))

        self._forward = jax.jit(functools.partial(
            _tcn_forward,
            layer_cfgs=self.layer_cfgs, kmax=self.kmax,
            c_in0=input_size, c_out=num_channels[-1],
            c_max=self.c_max, pad_max=self.pad_max))

    def __call__(self, x, lengths=None):
        # PyTorch forward: x = x.transpose(1, 2); out = self.mb_ms_tcn(x)
        # (the transpose now happens inside the kernel, not as an HBM pass).
        return self._forward(self.flat_weights, x)       # (B, num_channels[-1], T)


# ---------------------------------------------------------------------------
# Pure-JAX f32 reference (same folded weights, pre-bf16) to validate the kernel.
# bf16 MXU operands make a ~1e-2-scale mismatch vs this reference expected.
# ---------------------------------------------------------------------------
def _tcn_reference(ref_layers, x, layer_cfgs, kmax):
    hi = jax.lax.Precision.HIGHEST
    B, T, _ = x.shape
    h = jnp.transpose(x, (0, 2, 1)).astype(jnp.float32)
    for cfg, lyr in zip(layer_cfgs, ref_layers):
        d = cfg['dilation']
        pad = (kmax - 1) * d
        h_in = h
        for w, b in ((lyr['w0'], lyr['b0']), (lyr['w1'], lyr['b1'])):
            hp = jnp.pad(h, ((0, 0), (0, 0), (pad, 0)))
            acc = jnp.zeros((B, w.shape[1], T), jnp.float32)
            for j in range(kmax):
                acc = acc + jnp.einsum('oc,bct->bot', w[j],
                                       hp[:, :, j * d: j * d + T], precision=hi)
            h = jnp.maximum(acc + b[None, :, None], 0.0)
        if cfg['has_downsample']:
            res = jnp.einsum('oc,bct->bot', lyr['wd'], h_in, precision=hi) \
                  + lyr['bd'][None, :, None]
        else:
            res = h_in
        h = jnp.maximum(h + res, 0.0)
    return h


# ---------------------------------------------------------------------------
if __name__ == "__main__":
    key = jax.random.PRNGKey(0)
    k_param, k_x = jax.random.split(key)

    B, T, C_in = 2, 16, 8
    num_channels = [32, 32]                               # 2 TCN layers, hidden=32
    tcn_options = {'kernel_size': [3, 5], 'num_layers': 2,
                   'dropout': 0.2, 'width_mult': 1, 'dwpw': False}

    model = MultiscaleMultibranchTCNPallas(
        k_param, C_in, num_channels, tcn_options,
        dropout=0.2, relu_type='relu', dwpw=False)

    x = jax.random.normal(k_x, (B, T, C_in), jnp.float32)  # (batch, time, features)
    lengths = jnp.full((B,), T, jnp.int32)                  # unused by this forward

    out = model(x, lengths)
    out = jax.block_until_ready(out)

    assert out.shape == (B, num_channels[-1], T), out.shape
    assert bool(jnp.all(jnp.isfinite(out)))

    ref = _tcn_reference(model.ref_layers, x, model.layer_cfgs, model.kmax)
    max_err = float(jnp.max(jnp.abs(out - ref)))
    # Loose tolerance is expected: the kernel uses bf16 MXU operands vs an f32
    # HIGHEST-precision reference.
    assert bool(jnp.allclose(out, ref, atol=5e-2, rtol=5e-2)), max_err

    print("KERNEL_OK")
</pallas_src>

<mosaic_0001>
module attributes {stable_mosaic.version = 11 : i64} {
  func.func @_fused_tcn_kernel(%arg0: i32, %arg1: memref<1x16x8xf32, #tpu.memory_space<vmem>>, %arg2: memref<64x40xbf16, #tpu.memory_space<vmem>>, %arg3: memref<64x1xf32, #tpu.memory_space<vmem>>, %arg4: memref<32x160xbf16, #tpu.memory_space<vmem>>, %arg5: memref<32x1xf32, #tpu.memory_space<vmem>>, %arg6: memref<32x160xbf16, #tpu.memory_space<vmem>>, %arg7: memref<32x1xf32, #tpu.memory_space<vmem>>, %arg8: memref<32x160xbf16, #tpu.memory_space<vmem>>, %arg9: memref<32x1xf32, #tpu.memory_space<vmem>>, %arg10: memref<1x32x128xf32, #tpu.memory_space<vmem>>, %arg11: memref<32x136xf32, #tpu.memory_space<vmem>>) attributes {dimension_semantics = [#tpu.dimension_semantics<parallel>], iteration_bounds = array<i64: 2>, scalar_prefetch = 0 : i64, scratch_operands = 1 : i64, tpu.core_type = #tpu.core_type<tc>, window_params = [{transform_indices = @transform_0, window_bounds = array<i64: 1, 16, 8>}, {pipeline_mode = #tpu.pipeline_mode<synchronous>, transform_indices = @transform_1, window_bounds = array<i64: 64, 40>}, {pipeline_mode = #tpu.pipeline_mode<synchronous>, transform_indices = @transform_2, window_bounds = array<i64: 64, 1>}, {pipeline_mode = #tpu.pipeline_mode<synchronous>, transform_indices = @transform_3, window_bounds = array<i64: 32, 160>}, {pipeline_mode = #tpu.pipeline_mode<synchronous>, transform_indices = @transform_4, window_bounds = array<i64: 32, 1>}, {pipeline_mode = #tpu.pipeline_mode<synchronous>, transform_indices = @transform_5, window_bounds = array<i64: 32, 160>}, {pipeline_mode = #tpu.pipeline_mode<synchronous>, transform_indices = @transform_6, window_bounds = array<i64: 32, 1>}, {pipeline_mode = #tpu.pipeline_mode<synchronous>, transform_indices = @transform_7, window_bounds = array<i64: 32, 160>}, {pipeline_mode = #tpu.pipeline_mode<synchronous>, transform_indices = @transform_8, window_bounds = array<i64: 32, 1>}, {transform_indices = @transform_9, window_bounds = array<i64: 1, 32, 128>}]} {
    %cst = arith.constant 0.000000e+00 : f32
    %0 = vector.broadcast %cst : f32 to vector<32x8xf32>
    %c0 = arith.constant 0 : index
    %c0_0 = arith.constant 0 : index
    %1 = vector.load %arg11[%c0, %c0_0] : memref<32x136xf32, #tpu.memory_space<vmem>>, vector<32x8xf32>
    tpu.vector_store %arg11[%c0, %c0_0], %0 {strides = array<i32>} : memref<32x136xf32, #tpu.memory_space<vmem>>, vector<32x8xf32>,
    %c0_1 = arith.constant 0 : index
    %c0_2 = arith.constant 0 : index
    %c0_3 = arith.constant 0 : index
    %2 = vector.load %arg1[%c0_1, %c0_2, %c0_3] : memref<1x16x8xf32, #tpu.memory_space<vmem>>, vector<1x16x8xf32>
    %3 = vector.shape_cast %2 : vector<1x16x8xf32> to vector<16x8xf32>
    %4 = tpu.transpose %3, [1, 0] : vector<16x8xf32> -> vector<8x16xf32>
    %cst_4 = arith.constant 0.000000e+00 : f32
    %5 = vector.broadcast %cst_4 : f32 to vector<8x112xf32>
    %6 = tpu.concatenate %4, %5 in 1 : vector<8x16xf32>, vector<8x112xf32> -> vector<8x128xf32>
    %c0_5 = arith.constant 0 : index
    %c8 = arith.constant 8 : index
    %7 = vector.load %arg11[%c0_5, %c8] : memref<32x136xf32, #tpu.memory_space<vmem>>, vector<8x128xf32>
    tpu.vector_store %arg11[%c0_5, %c8], %6 {strides = array<i32>} : memref<32x136xf32, #tpu.memory_space<vmem>>, vector<8x128xf32>,
    %c0_6 = arith.constant 0 : index
    %c0_7 = arith.constant 0 : index
    %8 = vector.load %arg2[%c0_6, %c0_7] : memref<64x40xbf16, #tpu.memory_space<vmem>>, vector<64x40xbf16>
    %c0_8 = arith.constant 0 : index
    %c4 = arith.constant 4 : index
    %9 = vector.load %arg11[%c0_8, %c4] : memref<32x136xf32, #tpu.memory_space<vmem>>, vector<8x128xf32>
    %c0_9 = arith.constant 0 : index
    %c5 = arith.constant 5 : index
    %10 = vector.load %arg11[%c0_9, %c5] : memref<32x136xf32, #tpu.memory_space<vmem>>, vector<8x128xf32>
    %c0_10 = arith.constant 0 : index
    %c6 = arith.constant 6 : index
    %11 = vector.load %arg11[%c0_10, %c6] : memref<32x136xf32, #tpu.memory_space<vmem>>, vector<8x128xf32>
    %c0_11 = arith.constant 0 : index
    %c7 = arith.constant 7 : index
    %12 = vector.load %arg11[%c0_11, %c7] : memref<32x136xf32, #tpu.memory_space<vmem>>, vector<8x128xf32>
    %c0_12 = arith.constant 0 : index
    %c8_13 = arith.constant 8 : index
    %13 = vector.load %arg11[%c0_12, %c8_13] : memref<32x136xf32, #tpu.memory_space<vmem>>, vector<8x128xf32>
    %14 = tpu.concatenate %9, %10, %11, %12, %13 in 0 : vector<8x128xf32>, vector<8x128xf32>, vector<8x128xf32>, vector<8x128xf32>, vector<8x128xf32> -> vector<40x128xf32>
    %15 = arith.truncf %14 : vector<40x128xf32> to vector<40x128xbf16>
    %cst_14 = arith.constant dense<0.000000e+00> : vector<64x128xf32>
    %16 = tpu.matmul %8, %15, %cst_14 {dimension_numbers = #tpu.dot_dimension_numbers<[1], [0], [0], [1], [0, 0, 1, 1], [], []>} : vector<64x40xbf16>, vector<40x128xbf16>, vector<64x128xf32> -> vector<64x128xf32>
    %c0_15 = arith.constant 0 : index
    %c0_16 = arith.constant 0 : index
    %17 = vector.load %arg3[%c0_15, %c0_16] : memref<64x1xf32, #tpu.memory_space<vmem>>, vector<64x1xf32>
    %18 = vector.broadcast %17 : vector<64x1xf32> to vector<64x128xf32>
    %19 = arith.addf %16, %18 : vector<64x128xf32>
    %20 = vector.extract_strided_slice %19 {offsets = [0, 0], sizes = [32, 128], strides = [1, 1]} : vector<64x128xf32> to vector<32x128xf32>
    %cst_17 = arith.constant 0.000000e+00 : f32
    %21 = vector.broadcast %cst_17 : f32 to vector<32x128xf32>
    %22 = arith.maximumf %20, %21 : vector<32x128xf32>
    %23 = vector.extract_strided_slice %19 {offsets = [32, 0], sizes = [32, 128], strides = [1, 1]} : vector<64x128xf32> to vector<32x128xf32>
    %c0_18 = arith.constant 0 : index
    %c8_19 = arith.constant 8 : index
    %24 = vector.load %arg11[%c0_18, %c8_19] : memref<32x136xf32, #tpu.memory_space<vmem>>, vector<32x128xf32>
    tpu.vector_store %arg11[%c0_18, %c8_19], %22 {strides = array<i32>} : memref<32x136xf32, #tpu.memory_space<vmem>>, vector<32x128xf32>,
    %c0_20 = arith.constant 0 : index
    %c0_21 = arith.constant 0 : index
    %25 = vector.load %arg4[%c0_20, %c0_21] : memref<32x160xbf16, #tpu.memory_space<vmem>>, vector<32x160xbf16>
    %c0_22 = arith.constant 0 : index
    %c4_23 = arith.constant 4 : index
    %26 = vector.load %arg11[%c0_22, %c4_23] : memref<32x136xf32, #tpu.memory_space<vmem>>, vector<32x128xf32>
    %c0_24 = arith.constant 0 : index
    %c5_25 = arith.constant 5 : index
    %27 = vector.load %arg11[%c0_24, %c5_25] : memref<32x136xf32, #tpu.memory_space<vmem>>, vector<32x128xf32>
    %c0_26 = arith.constant 0 : index
    %c6_27 = arith.constant 6 : index
    %28 = vector.load %arg11[%c0_26, %c6_27] : memref<32x136xf32, #tpu.memory_space<vmem>>, vector<32x128xf32>
    %c0_28 = arith.constant 0 : index
    %c7_29 = arith.constant 7 : index
    %29 = vector.load %arg11[%c0_28, %c7_29] : memref<32x136xf32, #tpu.memory_space<vmem>>, vector<32x128xf32>
    %c0_30 = arith.constant 0 : index
    %c8_31 = arith.constant 8 : index
    %30 = vector.load %arg11[%c0_30, %c8_31] : memref<32x136xf32, #tpu.memory_space<vmem>>, vector<32x128xf32>
    %31 = tpu.concatenate %26, %27, %28, %29, %30 in 0 : vector<32x128xf32>, vector<32x128xf32>, vector<32x128xf32>, vector<32x128xf32>, vector<32x128xf32> -> vector<160x128xf32>
    %32 = arith.truncf %31 : vector<160x128xf32> to vector<160x128xbf16>
    %cst_32 = arith.constant dense<0.000000e+00> : vector<32x128xf32>
    %33 = tpu.matmul %25, %32, %cst_32 {dimension_numbers = #tpu.dot_dimension_numbers<[1], [0], [0], [1], [0, 0, 1, 1], [], []>} : vector<32x160xbf16>, vector<160x128xbf16>, vector<32x128xf32> -> vector<32x128xf32>
    %c0_33 = arith.constant 0 : index
    %c0_34 = arith.constant 0 : index
    %34 = vector.load %arg5[%c0_33, %c0_34] : memref<32x1xf32, #tpu.memory_space<vmem>>, vector<32x1xf32>
    %35 = vector.broadcast %34 : vector<32x1xf32> to vector<32x128xf32>
    %36 = arith.addf %33, %35 : vector<32x128xf32>
    %cst_35 = arith.constant 0.000000e+00 : f32
    %37 = vector.broadcast %cst_35 : f32 to vector<32x128xf32>
    %38 = arith.maximumf %36, %37 : vector<32x128xf32>
    %39 = arith.addf %38, %23 : vector<32x128xf32>
    %cst_36 = arith.constant 0.000000e+00 : f32
    %40 = vector.broadcast %cst_36 : f32 to vector<32x128xf32>
    %41 = arith.maximumf %39, %40 : vector<32x128xf32>
    %c0_37 = arith.constant 0 : index
    %c8_38 = arith.constant 8 : index
    %42 = vector.load %arg11[%c0_37, %c8_38] : memref<32x136xf32, #tpu.memory_space<vmem>>, vector<32x128xf32>
    tpu.vector_store %arg11[%c0_37, %c8_38], %41 {strides = array<i32>} : memref<32x136xf32, #tpu.memory_space<vmem>>, vector<32x128xf32>,
    %c0_39 = arith.constant 0 : index
    %c0_40 = arith.constant 0 : index
    %43 = vector.load %arg6[%c0_39, %c0_40] : memref<32x160xbf16, #tpu.memory_space<vmem>>, vector<32x160xbf16>
    %c0_41 = arith.constant 0 : index
    %c0_42 = arith.constant 0 : index
    %44 = vector.load %arg11[%c0_41, %c0_42] : memref<32x136xf32, #tpu.memory_space<vmem>>, vector<32x128xf32>
    %c0_43 = arith.constant 0 : index
    %c2 = arith.constant 2 : index
    %45 = vector.load %arg11[%c0_43, %c2] : memref<32x136xf32, #tpu.memory_space<vmem>>, vector<32x128xf32>
    %c0_44 = arith.constant 0 : index
    %c4_45 = arith.constant 4 : index
    %46 = vector.load %arg11[%c0_44, %c4_45] : memref<32x136xf32, #tpu.memory_space<vmem>>, vector<32x128xf32>
    %c0_46 = arith.constant 0 : index
    %c6_47 = arith.constant 6 : index
    %47 = vector.load %arg11[%c0_46, %c6_47] : memref<32x136xf32, #tpu.memory_space<vmem>>, vector<32x128xf32>
    %c0_48 = arith.constant 0 : index
    %c8_49 = arith.constant 8 : index
    %48 = vector.load %arg11[%c0_48, %c8_49] : memref<32x136xf32, #tpu.memory_space<vmem>>, vector<32x128xf32>
    %49 = tpu.concatenate %44, %45, %46, %47, %48 in 0 : vector<32x128xf32>, vector<32x128xf32>, vector<32x128xf32>, vector<32x128xf32>, vector<32x128xf32> -> vector<160x128xf32>
    %50 = arith.truncf %49 : vector<160x128xf32> to vector<160x128xbf16>
    %cst_50 = arith.constant dense<0.000000e+00> : vector<32x128xf32>
    %51 = tpu.matmul %43, %50, %cst_50 {dimension_numbers = #tpu.dot_dimension_numbers<[1], [0], [0], [1], [0, 0, 1, 1], [], []>} : vector<32x160xbf16>, vector<160x128xbf16>, vector<32x128xf32> -> vector<32x128xf32>
    %c0_51 = arith.constant 0 : index
    %c0_52 = arith.constant 0 : index
    %52 = vector.load %arg7[%c0_51, %c0_52] : memref<32x1xf32, #tpu.memory_space<vmem>>, vector<32x1xf32>
    %53 = vector.broadcast %52 : vector<32x1xf32> to vector<32x128xf32>
    %54 = arith.addf %51, %53 : vector<32x128xf32>
    %cst_53 = arith.constant 0.000000e+00 : f32
    %55 = vector.broadcast %cst_53 : f32 to vector<32x128xf32>
    %56 = arith.maximumf %54, %55 : vector<32x128xf32>
    %c0_54 = arith.constant 0 : index
    %c8_55 = arith.constant 8 : index
    %57 = vector.load %arg11[%c0_54, %c8_55] : memref<32x136xf32, #tpu.memory_space<vmem>>, vector<32x128xf32>
    tpu.vector_store %arg11[%c0_54, %c8_55], %56 {strides = array<i32>} : memref<32x136xf32, #tpu.memory_space<vmem>>, vector<32x128xf32>,
    %c0_56 = arith.constant 0 : index
    %c0_57 = arith.constant 0 : index
    %58 = vector.load %arg8[%c0_56, %c0_57] : memref<32x160xbf16, #tpu.memory_space<vmem>>, vector<32x160xbf16>
    %c0_58 = arith.constant 0 : index
    %c0_59 = arith.constant 0 : index
    %59 = vector.load %arg11[%c0_58, %c0_59] : memref<32x136xf32, #tpu.memory_space<vmem>>, vector<32x128xf32>
    %c0_60 = arith.constant 0 : index
    %c2_61 = arith.constant 2 : index
    %60 = vector.load %arg11[%c0_60, %c2_61] : memref<32x136xf32, #tpu.memory_space<vmem>>, vector<32x128xf32>
    %c0_62 = arith.constant 0 : index
    %c4_63 = arith.constant 4 : index
    %61 = vector.load %arg11[%c0_62, %c4_63] : memref<32x136xf32, #tpu.memory_space<vmem>>, vector<32x128xf32>
    %c0_64 = arith.constant 0 : index
    %c6_65 = arith.constant 6 : index
    %62 = vector.load %arg11[%c0_64, %c6_65] : memref<32x136xf32, #tpu.memory_space<vmem>>, vector<32x128xf32>
    %c0_66 = arith.constant 0 : index
    %c8_67 = arith.constant 8 : index
    %63 = vector.load %arg11[%c0_66, %c8_67] : memref<32x136xf32, #tpu.memory_space<vmem>>, vector<32x128xf32>
    %64 = tpu.concatenate %59, %60, %61, %62, %63 in 0 : vector<32x128xf32>, vector<32x128xf32>, vector<32x128xf32>, vector<32x128xf32>, vector<32x128xf32> -> vector<160x128xf32>
    %65 = arith.truncf %64 : vector<160x128xf32> to vector<160x128xbf16>
    %cst_68 = arith.constant dense<0.000000e+00> : vector<32x128xf32>
    %66 = tpu.matmul %58, %65, %cst_68 {dimension_numbers = #tpu.dot_dimension_numbers<[1], [0], [0], [1], [0, 0, 1, 1], [], []>} : vector<32x160xbf16>, vector<160x128xbf16>, vector<32x128xf32> -> vector<32x128xf32>
    %c0_69 = arith.constant 0 : index
    %c0_70 = arith.constant 0 : index
    %67 = vector.load %arg9[%c0_69, %c0_70] : memref<32x1xf32, #tpu.memory_space<vmem>>, vector<32x1xf32>
    %68 = vector.broadcast %67 : vector<32x1xf32> to vector<32x128xf32>
    %69 = arith.addf %66, %68 : vector<32x128xf32>
    %cst_71 = arith.constant 0.000000e+00 : f32
    %70 = vector.broadcast %cst_71 : f32 to vector<32x128xf32>
    %71 = arith.maximumf %69, %70 : vector<32x128xf32>
    %72 = arith.addf %71, %41 : vector<32x128xf32>
    %cst_72 = arith.constant 0.000000e+00 : f32
    %73 = vector.broadcast %cst_72 : f32 to vector<32x128xf32>
    %74 = arith.maximumf %72, %73 : vector<32x128xf32>
    %c0_73 = arith.constant 0 : index
    %c0_74 = arith.constant 0 : index
    %c0_75 = arith.constant 0 : index
    %75 = vector.load %arg10[%c0_73, %c0_74, %c0_75] : memref<1x32x128xf32, #tpu.memory_space<vmem>>, vector<1x32x128xf32>
    %76 = vector.shape_cast %75 : vector<1x32x128xf32> to vector<32x128xf32>
    %77 = vector.shape_cast %74 : vector<32x128xf32> to vector<1x32x128xf32>
    tpu.vector_store %arg10[%c0_73, %c0_74, %c0_75], %77 {strides = array<i32>} : memref<1x32x128xf32, #tpu.memory_space<vmem>>, vector<1x32x128xf32>,
    return
  }
  func.func @transform_0(%arg0: i32) -> (i32, i32, i32) {
    %c0_i32 = arith.constant 0 : i32
    %c0_i32_0 = arith.constant 0 : i32
    %c0_i32_1 = arith.constant 0 : i32
    return %arg0, %c0_i32, %c0_i32_0 : i32, i32, i32
  }
  func.func @transform_1(%arg0: i32) -> (i32, i32) {
    %c0_i32 = arith.constant 0 : i32
    %c0_i32_0 = arith.constant 0 : i32
    %c0_i32_1 = arith.constant 0 : i32
    return %c0_i32, %c0_i32_0 : i32, i32
  }
  func.func @transform_2(%arg0: i32) -> (i32, i32) {
    %c0_i32 = arith.constant 0 : i32
    %c0_i32_0 = arith.constant 0 : i32
    %c0_i32_1 = arith.constant 0 : i32
    return %c0_i32, %c0_i32_0 : i32, i32
  }
  func.func @transform_3(%arg0: i32) -> (i32, i32) {
    %c0_i32 = arith.constant 0 : i32
    %c0_i32_0 = arith.constant 0 : i32
    %c0_i32_1 = arith.constant 0 : i32
    return %c0_i32, %c0_i32_0 : i32, i32
  }
  func.func @transform_4(%arg0: i32) -> (i32, i32) {
    %c0_i32 = arith.constant 0 : i32
    %c0_i32_0 = arith.constant 0 : i32
    %c0_i32_1 = arith.constant 0 : i32
    return %c0_i32, %c0_i32_0 : i32, i32
  }
  func.func @transform_5(%arg0: i32) -> (i32, i32) {
    %c0_i32 = arith.constant 0 : i32
    %c0_i32_0 = arith.constant 0 : i32
    %c0_i32_1 = arith.constant 0 : i32
    return %c0_i32, %c0_i32_0 : i32, i32
  }
  func.func @transform_6(%arg0: i32) -> (i32, i32) {
    %c0_i32 = arith.constant 0 : i32
    %c0_i32_0 = arith.constant 0 : i32
    %c0_i32_1 = arith.constant 0 : i32
    return %c0_i32, %c0_i32_0 : i32, i32
  }
  func.func @transform_7(%arg0: i32) -> (i32, i32) {
    %c0_i32 = arith.constant 0 : i32
    %c0_i32_0 = arith.constant 0 : i32
    %c0_i32_1 = arith.constant 0 : i32
    return %c0_i32, %c0_i32_0 : i32, i32
  }
  func.func @transform_8(%arg0: i32) -> (i32, i32) {
    %c0_i32 = arith.constant 0 : i32
    %c0_i32_0 = arith.constant 0 : i32
    %c0_i32_1 = arith.constant 0 : i32
    return %c0_i32, %c0_i32_0 : i32, i32
  }
  func.func @transform_9(%arg0: i32) -> (i32, i32, i32) {
    %c0_i32 = arith.constant 0 : i32
    %c0_i32_0 = arith.constant 0 : i32
    %c0_i32_1 = arith.constant 0 : i32
    return %arg0, %c0_i32, %c0_i32_0 : i32, i32, i32
  }
}

</mosaic_0001>

<llo_original>
// kernel: _tcn_forward.1
$region0: #{_tcn_forward.1}
  #allocation0 [shape = 'u32[]', space=smem, size = 0x4, offset = 0x4, fixed_abs, tag = 'smem constant byte address 0x4 - core index']
  #allocation1 [shape = 'u32[144,128]{1,0:T(1,128)}', space=vmem, size = 0x12000, scoped, tag = 'internal scratch']
  #allocation2 [shape = 'f32[32,136]{1,0:T(8,128)}', space=vmem, size = 0x8000, scoped, tag = 'scratch operand']
  %s0 = inlined_call_operand.vmem [shape: f32[2,16,8], index: 0, kind: input, shape index: {}]
  %s1 = inlined_call_operand.vmem [shape: bf16[64,40], index: 1, kind: input, shape index: {}]
  %s2 = inlined_call_operand.vmem [shape: f32[64,1], index: 2, kind: input, shape index: {}]
  %s3 = inlined_call_operand.vmem [shape: bf16[32,160], index: 3, kind: input, shape index: {}]
  %s4 = inlined_call_operand.vmem [shape: f32[32,1], index: 4, kind: input, shape index: {}]
  %s5 = inlined_call_operand.vmem [shape: bf16[32,160], index: 5, kind: input, shape index: {}]
  %s6 = inlined_call_operand.vmem [shape: f32[32,1], index: 6, kind: input, shape index: {}]
  %s7 = inlined_call_operand.vmem [shape: bf16[32,160], index: 7, kind: input, shape index: {}]
  %s8 = inlined_call_operand.vmem [shape: f32[32,1], index: 8, kind: input, shape index: {}]
  %s9 = inlined_call_operand.vmem [shape: f32[2,32,128], index: 9, kind: output, shape index: {}]
  %s10 = sld [smem:[#allocation0]]
  $region69: #{_tcn_forward.1} parent=0
    _
  %s12 = ssub.s32 1, %s10
  %s13 = scalar_select 0, %s12, %s10
  loop: start=0, step=1, limit=4
  $region2: #{_tcn_forward.1} parent=0 // loop_pre_header
    _
  $region3: #{_tcn_forward.1} parent=0 // loop_header
    %s15 = sphi 0, %s19
    %p16 = scmp.ge.s32.totalorder %s15, 4
    %s25 = sphi 0, %s27
    %s28 = sphi 0, %s25
    %s29 = sphi 0, %s28
    %s45 = sphi 0, %s29
    %s49 = sphi 0, %s49
    %s51 = sphi 0, %s49
    %s52 = sphi 0, %s51
    %s66 = sphi 0, %s52
    %s70 = sphi 0, %s70
    %s72 = sphi 0, %s70
    %s73 = sphi 0, %s72
    %s87 = sphi 0, %s73
    %s91 = sphi 0, %s91
    %s93 = sphi 0, %s91
    %s94 = sphi 0, %s93
    %s108 = sphi 0, %s94
    %s112 = sphi 0, %s112
    %s114 = sphi 0, %s112
    %s115 = sphi 0, %s114
    %s129 = sphi 0, %s115
    %s133 = sphi 0, %s133
    %s135 = sphi 0, %s133
    %s136 = sphi 0, %s135
    %s150 = sphi 0, %s136
    %s154 = sphi 0, %s154
    %s156 = sphi 0, %s154
    %s157 = sphi 0, %s156
    %s171 = sphi 0, %s157
    %s175 = sphi 0, %s175
    %s177 = sphi 0, %s175
    %s178 = sphi 0, %s177
    %s192 = sphi 0, %s178
    %s196 = sphi 0, %s196
    %s198 = sphi 0, %s196
    %s199 = sphi 0, %s198
    %s213 = sphi 0, %s199
    %s219 = sphi 0, %s221
    %s222 = sphi 0, %s219
    %s223 = sphi 0, %s222
    %s239 = sphi 0, %s223
  $region4: #{_tcn_forward.1} parent=0 // loop_header_branch
    %18 = sbr.rel (%p16) target = $region8
  $region5: #{_tcn_forward.1} parent=0 // loop_body
    %s20 = ssub.s32 %s15, 1
    %s21 = ssub.s32 %s15, 2
    %s22 = sadd.s32 %s15, 1
    %s23 = ssub.s32 %s15, %s22
    %p24 = scmp.eq.s32.totalorder %s23, 0
    %s26 = sadd.s32 %s25, 1
    %s27 = scalar_select %p24, %s25, %s26
    %p30 = pneg %p24
    %p31 = scmp.eq.s32.totalorder %s15, 1
    %p32 = por %p30, %p31
    %p33 = scmp.ne.s32.totalorder %s25, %s28
    %p34 = scmp.eq.s32.totalorder %s15, 0
    %p35 = por %p33, %p34
    %p36 = scmp.ne.s32.totalorder %s25, %s28
    %p37 = scmp.eq.s32.totalorder %s20, 1
    %p38 = por %p36, %p37
    %p39 = scmp.ne.s32.totalorder %s28, %s29
    %p40 = scmp.eq.s32.totalorder %s20, 0
    %p41 = por %p39, %p40
    %p42 = scmp.ne.s32.totalorder %s28, %s29
    %p43 = scmp.eq.s32.totalorder %s21, 1
    %p44 = por %p42, %p43
    %p46 = scmp.ne.s32.totalorder %s29, %s45
    %p47 = scmp.eq.s32.totalorder %s21, 0
    %p48 = por %p46, %p47
    %s50 = sadd.s32 %s49, 1
    %p53 = scmp.eq.s32.totalorder %s15, 1
    %p54 = scmp.ne.s32.totalorder %s49, %s51
    %p55 = scmp.eq.s32.totalorder %s15, 0
    %p56 = por %p54, %p55
    %p57 = scmp.ne.s32.totalorder %s49, %s51
    %p58 = scmp.eq.s32.totalorder %s20, 1
    %p59 = por %p57, %p58
    %p60 = scmp.ne.s32.totalorder %s51, %s52
    %p61 = scmp.eq.s32.totalorder %s20, 0
    %p62 = por %p60, %p61
    %p63 = scmp.ne.s32.totalorder %s51, %s52
    %p64 = scmp.eq.s32.totalorder %s21, 1
    %p65 = por %p63, %p64
    %p67 = scmp.ne.s32.totalorder %s52, %s66
    %p68 = scmp.eq.s32.totalorder %s21, 0
    %p69 = por %p67, %p68
    %s71 = sadd.s32 %s70, 1
    %p74 = scmp.eq.s32.totalorder %s15, 1
    %p75 = scmp.ne.s32.totalorder %s70, %s72
    %p76 = scmp.eq.s32.totalorder %s15, 0
    %p77 = por %p75, %p76
    %p78 = scmp.ne.s32.totalorder %s70, %s72
    %p79 = scmp.eq.s32.totalorder %s20, 1
    %p80 = por %p78, %p79
    %p81 = scmp.ne.s32.totalorder %s72, %s73
    %p82 = scmp.eq.s32.totalorder %s20, 0
    %p83 = por %p81, %p82
    %p84 = scmp.ne.s32.totalorder %s72, %s73
    %p85 = scmp.eq.s32.totalorder %s21, 1
    %p86 = por %p84, %p85
    %p88 = scmp.ne.s32.totalorder %s73, %s87
    %p89 = scmp.eq.s32.totalorder %s21, 0
    %p90 = por %p88, %p89
    %s92 = sadd.s32 %s91, 1
    %p95 = scmp.eq.s32.totalorder %s15, 1
    %p96 = scmp.ne.s32.totalorder %s91, %s93
    %p97 = scmp.eq.s32.totalorder %s15, 0
    %p98 = por %p96, %p97
    %p99 = scmp.ne.s32.totalorder %s91, %s93
    %p100 = scmp.eq.s32.totalorder %s20, 1
    %p101 = por %p99, %p100
    %p102 = scmp.ne.s32.totalorder %s93, %s94
    %p103 = scmp.eq.s32.totalorder %s20, 0
    %p104 = por %p102, %p103
    %p105 = scmp.ne.s32.totalorder %s93, %s94
    %p106 = scmp.eq.s32.totalorder %s21, 1
    %p107 = por %p105, %p106
    %p109 = scmp.ne.s32.totalorder %s94, %s108
    %p110 = scmp.eq.s32.totalorder %s21, 0
    %p111 = por %p109, %p110
    %s113 = sadd.s32 %s112, 1
    %p116 = scmp.eq.s32.totalorder %s15, 1
    %p117 = scmp.ne.s32.totalorder %s112, %s114
    %p118 = scmp.eq.s32.totalorder %s15, 0
    %p119 = por %p117, %p118
    %p120 = scmp.ne.s32.totalorder %s112, %s114
    %p121 = scmp.eq.s32.totalorder %s20, 1
    %p122 = por %p120, %p121
    %p123 = scmp.ne.s32.totalorder %s114, %s115
    %p124 = scmp.eq.s32.totalorder %s20, 0
    %p125 = por %p123, %p124
    %p126 = scmp.ne.s32.totalorder %s114, %s115
    %p127 = scmp.eq.s32.totalorder %s21, 1
    %p128 = por %p126, %p127
    %p130 = scmp.ne.s32.totalorder %s115, %s129
    %p131 = scmp.eq.s32.totalorder %s21, 0
    %p132 = por %p130, %p131
    %s134 = sadd.s32 %s133, 1
    %p137 = scmp.eq.s32.totalorder %s15, 1
    %p138 = scmp.ne.s32.totalorder %s133, %s135
    %p139 = scmp.eq.s32.totalorder %s15, 0
    %p140 = por %p138, %p139
    %p141 = scmp.ne.s32.totalorder %s133, %s135
    %p142 = scmp.eq.s32.totalorder %s20, 1
    %p143 = por %p141, %p142
    %p144 = scmp.ne.s32.totalorder %s135, %s136
    %p145 = scmp.eq.s32.totalorder %s20, 0
    %p146 = por %p144, %p145
    %p147 = scmp.ne.s32.totalorder %s135, %s136
    %p148 = scmp.eq.s32.totalorder %s21, 1
    %p149 = por %p147, %p148
    %p151 = scmp.ne.s32.totalorder %s136, %s150
    %p152 = scmp.eq.s32.totalorder %s21, 0
    %p153 = por %p151, %p152
    %s155 = sadd.s32 %s154, 1
    %p158 = scmp.eq.s32.totalorder %s15, 1
    %p159 = scmp.ne.s32.totalorder %s154, %s156
    %p160 = scmp.eq.s32.totalorder %s15, 0
    %p161 = por %p159, %p160
    %p162 = scmp.ne.s32.totalorder %s154, %s156
    %p163 = scmp.eq.s32.totalorder %s20, 1
    %p164 = por %p162, %p163
    %p165 = scmp.ne.s32.totalorder %s156, %s157
    %p166 = scmp.eq.s32.totalorder %s20, 0
    %p167 = por %p165, %p166
    %p168 = scmp.ne.s32.totalorder %s156, %s157
    %p169 = scmp.eq.s32.totalorder %s21, 1
    %p170 = por %p168, %p169
    %p172 = scmp.ne.s32.totalorder %s157, %s171
    %p173 = scmp.eq.s32.totalorder %s21, 0
    %p174 = por %p172, %p173
    %s176 = sadd.s32 %s175, 1
    %p179 = scmp.eq.s32.totalorder %s15, 1
    %p180 = scmp.ne.s32.totalorder %s175, %s177
    %p181 = scmp.eq.s32.totalorder %s15, 0
    %p182 = por %p180, %p181
    %p183 = scmp.ne.s32.totalorder %s175, %s177
    %p184 = scmp.eq.s32.totalorder %s20, 1
    %p185 = por %p183, %p184
    %p186 = scmp.ne.s32.totalorder %s177, %s178
    %p187 = scmp.eq.s32.totalorder %s20, 0
    %p188 = por %p186, %p187
    %p189 = scmp.ne.s32.totalorder %s177, %s178
    %p190 = scmp.eq.s32.totalorder %s21, 1
    %p191 = por %p189, %p190
    %p193 = scmp.ne.s32.totalorder %s178, %s192
    %p194 = scmp.eq.s32.totalorder %s21, 0
    %p195 = por %p193, %p194
    %s197 = sadd.s32 %s196, 1
    %p200 = scmp.eq.s32.totalorder %s15, 1
    %p201 = scmp.ne.s32.totalorder %s196, %s198
    %p202 = scmp.eq.s32.totalorder %s15, 0
    %p203 = por %p201, %p202
    %p204 = scmp.ne.s32.totalorder %s196, %s198
    %p205 = scmp.eq.s32.totalorder %s20, 1
    %p206 = por %p204, %p205
    %p207 = scmp.ne.s32.totalorder %s198, %s199
    %p208 = scmp.eq.s32.totalorder %s20, 0
    %p209 = por %p207, %p208
    %p210 = scmp.ne.s32.totalorder %s198, %s199
    %p211 = scmp.eq.s32.totalorder %s21, 1
    %p212 = por %p210, %p211
    %p214 = scmp.ne.s32.totalorder %s199, %s213
    %p215 = scmp.eq.s32.totalorder %s21, 0
    %p216 = por %p214, %p215
    %s217 = ssub.s32 %s15, %s22
    %p218 = scmp.eq.s32.totalorder %s217, 0
    %s220 = sadd.s32 %s219, 1
    %s221 = scalar_select %p218, %s219, %s220
    %p224 = pneg %p218
    %p225 = scmp.eq.s32.totalorder %s15, 1
    %p226 = por %p224, %p225
    %p227 = scmp.ne.s32.totalorder %s219, %s222
    %p228 = scmp.eq.s32.totalorder %s15, 0
    %p229 = por %p227, %p228
    %p230 = scmp.ne.s32.totalorder %s219, %s222
    %p231 = scmp.eq.s32.totalorder %s20, 1
    %p232 = por %p230, %p231
    %p233 = scmp.ne.s32.totalorder %s222, %s223
    %p234 = scmp.eq.s32.totalorder %s20, 0
    %p235 = por %p233, %p234
    %p236 = scmp.ne.s32.totalorder %s222, %s223
    %p237 = scmp.eq.s32.totalorder %s21, 1
    %p238 = por %p236, %p237
    %p240 = scmp.ne.s32.totalorder %s223, %s239
    %p241 = scmp.eq.s32.totalorder %s21, 0
    %p242 = por %p240, %p241
    %p243 = scmp.le.s32.totalorder 1, %s15
    %p244 = scmp.lt.s32.totalorder %s15, 3
    %p245 = pnand %p243, %p244
    %p246 = pneg %p245
    // Predicated region
    $region9: #{_tcn_forward.1} parent=5 // pred_check
      _
    $region10: #{_tcn_forward.1} parent=5 // pred_check_branch
      %248 = sbr.rel (%p245) target = $region12
    $region11: #{_tcn_forward.1} parent=5 // pred_region
      %s249 = ssub.s32 %s15, 1
      // Predicated region
      $region13: #{_tcn_forward.1} parent=11 // pred_check
        %p250 = pneg %p62
      $region14: #{_tcn_forward.1} parent=11 // pred_check_branch
        %252 = sbr.rel (%p250) target = $region16
      $region15: #{_tcn_forward.1} parent=11 // pred_region
        _
      $region16: #{_tcn_forward.1} parent=11 // pred_fallthru
        _
      // Predicated region
      $region17: #{_tcn_forward.1} parent=11 // pred_check
        %p253 = pneg %p83
      $region18: #{_tcn_forward.1} parent=11 // pred_check_branch
        %255 = sbr.rel (%p253) target = $region20
      $region19: #{_tcn_forward.1} parent=11 // pred_region
        _
      $region20: #{_tcn_forward.1} parent=11 // pred_fallthru
        _
      // Predicated region
      $region21: #{_tcn_forward.1} parent=11 // pred_check
        %p256 = pneg %p104
      $region22: #{_tcn_forward.1} parent=11 // pred_check_branch
        %258 = sbr.rel (%p256) target = $region24
      $region23: #{_tcn_forward.1} parent=11 // pred_region
        _
      $region24: #{_tcn_forward.1} parent=11 // pred_fallthru
        _
      // Predicated region
      $region25: #{_tcn_forward.1} parent=11 // pred_check
        %p259 = pneg %p125
      $region26: #{_tcn_forward.1} parent=11 // pred_check_branch
        %261 = sbr.rel (%p259) target = $region28
      $region27: #{_tcn_forward.1} parent=11 // pred_region
        _
      $region28: #{_tcn_forward.1} parent=11 // pred_fallthru
        _
      // Predicated region
      $region29: #{_tcn_forward.1} parent=11 // pred_check
        %p262 = pneg %p146
      $region30: #{_tcn_forward.1} parent=11 // pred_check_branch
        %264 = sbr.rel (%p262) target = $region32
      $region31: #{_tcn_forward.1} parent=11 // pred_region
        _
      $region32: #{_tcn_forward.1} parent=11 // pred_fallthru
        _
      // Predicated region
      $region33: #{_tcn_forward.1} parent=11 // pred_check
        %p265 = pneg %p167
      $region34: #{_tcn_forward.1} parent=11 // pred_check_branch
        %267 = sbr.rel (%p265) target = $region36
      $region35: #{_tcn_forward.1} parent=11 // pred_region
        _
      $region36: #{_tcn_forward.1} parent=11 // pred_fallthru
        _
      // Predicated region
      $region37: #{_tcn_forward.1} parent=11 // pred_check
        %p268 = pneg %p188
      $region38: #{_tcn_forward.1} parent=11 // pred_check_branch
        %270 = sbr.rel (%p268) target = $region40
      $region39: #{_tcn_forward.1} parent=11 // pred_region
        _
      $region40: #{_tcn_forward.1} parent=11 // pred_fallthru
        _
      // Predicated region
      $region41: #{_tcn_forward.1} parent=11 // pred_check
        %p271 = pneg %p209
      $region42: #{_tcn_forward.1} parent=11 // pred_check_branch
        %273 = sbr.rel (%p271) target = $region44
      $region43: #{_tcn_forward.1} parent=11 // pred_region
        _
      $region44: #{_tcn_forward.1} parent=11 // pred_fallthru
        _
    $region12: #{_tcn_forward.1} parent=5 // pred_fallthru
      _
    %p274 = scmp.lt.s32.totalorder %s15, 2
    // Predicated region
    $region45: #{_tcn_forward.1} parent=5 // pred_check
      %p275 = pneg %p274
    $region46: #{_tcn_forward.1} parent=5 // pred_check_branch
      %277 = sbr.rel (%p275) target = $region48
    $region47: #{_tcn_forward.1} parent=5 // pred_region
      // Predicated region
      $region49: #{_tcn_forward.1} parent=47 // pred_check
        %p278 = pneg %p35
      $region50: #{_tcn_forward.1} parent=47 // pred_check_branch
        %280 = sbr.rel (%p278) target = $region52
      $region51: #{_tcn_forward.1} parent=47 // pred_region
        %p281 = scmp.lt.s32.totalorder %s15, 1
        %s282 = scalar_select %p281, %s15, 1
        %s283 = smul.addr %s282, 2
        %s284 = smul.addr %s283, 8
        %s285 = scalar_lea.vmem %s0, %s284
      $region52: #{_tcn_forward.1} parent=47 // pred_fallthru
        _
    $region48: #{_tcn_forward.1} parent=5 // pred_fallthru
      _
    %p286 = scmp.le.s32.totalorder 1, %s15
    %p287 = scmp.lt.s32.totalorder %s15, 3
    %p288 = pnand %p286, %p287
    %p289 = pneg %p288
    // Predicated region
    $region53: #{_tcn_forward.1} parent=5 // pred_check
      _
    $region54: #{_tcn_forward.1} parent=5 // pred_check_branch
      %291 = sbr.rel (%p288) target = $region56
    $region55: #{_tcn_forward.1} parent=5 // pred_region
      %s292 = ssub.s32 %s15, 1
      %p293 = scmp.lt.s32.totalorder %s20, 1
      %s294 = scalar_select %p293, %s20, 1
      %s295 = smul.addr %s294, 2
      %s296 = smul.addr %s295, 8
      %s297 = scalar_lea.vmem %s0, %s296
      %p298 = pneg %p41
      %p299 = pneg %p38
      %p300 = pneg %p62
      %p301 = pneg %p59
      %p302 = pneg %p83
      %p303 = pneg %p80
      %p304 = pneg %p104
      %p305 = pneg %p101
      %p306 = pneg %p125
      %p307 = pneg %p122
      %p308 = pneg %p146
      %p309 = pneg %p143
      %p310 = pneg %p167
      %p311 = pneg %p164
      %p312 = pneg %p188
      %p313 = pneg %p185
      %p314 = pneg %p209
      %p315 = pneg %p206
      %p316 = pneg %p235
      %p317 = pneg %p232
      %p318 = scmp.lt.s32.totalorder %s20, 1
      %s319 = scalar_select %p318, %s20, 1
      %s320 = smul.addr %s319, 4
      %s321 = smul.addr %s320, 8
      %s322 = scalar_lea.vmem %s9, %s321
      %p323 = scmp.lt.s32.totalorder %s20, 1
      %s324 = scalar_select %p323, %s20, 1
      %s325 = smul.addr %s324, 2
      %s326 = smul.addr %s325, 8
      %s327 = scalar_lea.vmem %s0, %s326
      %p328 = scmp.lt.s32.totalorder %s20, 1
      %s329 = scalar_select %p328, %s20, 1
      %s330 = smul.addr %s329, 4
      %s331 = smul.addr %s330, 8
      %s332 = scalar_lea.vmem %s9, %s331
      %vm334 = vcmask 64512
      %335 = vst.msk [vmem:[#allocation2] sm:$0xff] %vm334, 0.0
      %336 = vst.msk [vmem:[#allocation2 + $0x10] sm:$0xff] %vm334, 0.0
      %337 = vst.msk [vmem:[#allocation2 + $0x20] sm:$0xff] %vm334, 0.0
      %338 = vst.msk [vmem:[#allocation2 + $0x30] sm:$0xff] %vm334, 0.0
      %v339 = vld [vmem:[%s327] sm:$0xff]
      %v340 = vld [vmem:[%s327 + $0x8] sm:$0xff]
      %341 = vxpose.xlu0.b32.start [1/16] %v339, 128
      %342 = vxpose.xlu0.b32.cont [2/16] %v340, 128
      %343 = vxpose.xlu0.b32.cont [3/16] 0.0, 128
      %344 = vxpose.xlu0.b32.cont [4/16] 0.0, 128
      %345 = vxpose.xlu0.b32.cont [5/16] 0.0, 128
      %346 = vxpose.xlu0.b32.cont [6/16] 0.0, 128
      %347 = vxpose.xlu0.b32.cont [7/16] 0.0, 128
      %348 = vxpose.xlu0.b32.cont [8/16] 0.0, 128
      %349 = vxpose.xlu0.b32.cont [9/16] 0.0, 128
      %350 = vxpose.xlu0.b32.cont [10/16] 0.0, 128
      %351 = vxpose.xlu0.b32.cont [11/16] 0.0, 128
      %352 = vxpose.xlu0.b32.cont [12/16] 0.0, 128
      %353 = vxpose.xlu0.b32.cont [13/16] 0.0, 128
      %354 = vxpose.xlu0.b32.cont [14/16] 0.0, 128
      %355 = vxpose.xlu0.b32.cont [15/16] 0.0, 128
      %356 = vxpose.xlu0.b32.end [16/16] 0.0, 128
      %v357 = vpop.trf.xlu0
      %v358 = vpop.trf.xlu0
      %v359 = vpop.trf.xlu0
      %v360 = vpop.trf.xlu0
      %v361 = vpop.trf.xlu0
      %v362 = vpop.trf.xlu0
      %v363 = vpop.trf.xlu0
      %v364 = vpop.trf.xlu0
      %v365 = vpop.trf.xlu0
      %v366 = vpop.trf.xlu0
      %v367 = vpop.trf.xlu0
      %v368 = vpop.trf.xlu0
      %v369 = vpop.trf.xlu0
      %v370 = vpop.trf.xlu0
      %v371 = vpop.trf.xlu0
      %v372 = vpop.trf.xlu0
      %vm373 = vcmask 130048
      %v374 = vsel %vm373, %v357, 0.0
      %376 = vrot.lane.b32.xlu0 %v374, 8
      %v377 = vpop.permute.xlu0 %376
      %vm379 = vcmask 1047616
      %380 = vst.msk [vmem:[#allocation2] sm:$0xff] %vm379, %v377
      %381 = vst.msk [vmem:[#allocation2 + $0x8] sm:$0xff] %vm334, %v377
      %v382 = vld [vmem:[%s1] sm:$0xf]
      %v383 = vld [vmem:[%s1 + $0x4] sm:$0xf]
      %v384 = vld [vmem:[%s1 + $0x8] sm:$0xf]
      %v385 = vld [vmem:[%s1 + $0xc] sm:$0xf]
      %v386 = vld [vmem:[%s1 + $0x10] sm:$0xf]
      %v387 = vld [vmem:[%s1 + $0x14] sm:$0xf]
      %v388 = vld [vmem:[%s1 + $0x18] sm:$0xf]
      %v389 = vld [vmem:[%s1 + $0x1c] sm:$0xf]
      %v390 = vld [vmem:[#allocation2] sm:$0xff]
      %v391 = vld [vmem:[#allocation2 + $0x8] sm:$0xff]
      %394 = vrot.lane.b32.xlu0 %v390, 127
      %v395 = vpop.permute.xlu0 %394
      %396 = vrot.lane.b32.xlu0 %v391, 127
      %v397 = vpop.permute.xlu0 %396
      %vm398 = vcmask 1039360
      %v399 = vsel %vm398, %v395, %v397
      %402 = vrot.lane.b32.xlu0 %v390, 126
      %v403 = vpop.permute.xlu0 %402
      %404 = vrot.lane.b32.xlu0 %v391, 126
      %v405 = vpop.permute.xlu0 %404
      %vm406 = vcmask 1031168
      %v407 = vsel %vm406, %v403, %v405
      %410 = vrot.lane.b32.xlu0 %v390, 125
      %v411 = vpop.permute.xlu0 %410
      %412 = vrot.lane.b32.xlu0 %v391, 125
      %v413 = vpop.permute.xlu0 %412
      %vm414 = vcmask 1022976
      %v415 = vsel %vm414, %v411, %v413
      %418 = vrot.lane.b32.xlu0 %v390, 124
      %v419 = vpop.permute.xlu0 %418
      %420 = vrot.lane.b32.xlu0 %v391, 124
      %v421 = vpop.permute.xlu0 %420
      %vm422 = vcmask 1014784
      %v423 = vsel %vm422, %v419, %v421
      %v426 = vpack.c.bf16 %v399, %v390
      %v427 = vpack.c.bf16 %v397, %v391
      %v428 = vpack.c.bf16 %v415, %v407
      %v429 = vpack.c.bf16 %v413, %v405
      %v430 = vpack.c.bf16 %v423, %v423
      %v431 = vpack.c.bf16 %v421, %v421
      %v432 = vld [vmem:[%s2] sm:$0xff]
      %v433 = vld [vmem:[%s2 + $0x8] sm:$0xff]
      %v434 = vld [vmem:[%s2 + $0x10] sm:$0xff]
      %v435 = vld [vmem:[%s2 + $0x18] sm:$0xff]
      %v436 = vld [vmem:[%s2 + $0x20] sm:$0xff]
      %v437 = vld [vmem:[%s2 + $0x28] sm:$0xff]
      %v438 = vld [vmem:[%s2 + $0x30] sm:$0xff]
      %v439 = vld [vmem:[%s2 + $0x38] sm:$0xff]
      %441 = vset.pattern.permute.xlu0 0
      %442 = vperm.xlu0 %441, %v432
      %v443 = vpop.permute.xlu0 %442
      %446 = vset.pattern.permute.xlu0 0
      %447 = vperm.xlu0 %446, %v433
      %v448 = vpop.permute.xlu0 %447
      %451 = vset.pattern.permute.xlu0 0
      %452 = vperm.xlu0 %451, %v434
      %v453 = vpop.permute.xlu0 %452
      %456 = vset.pattern.permute.xlu0 0
      %457 = vperm.xlu0 %456, %v435
      %v458 = vpop.permute.xlu0 %457
      %461 = vset.pattern.permute.xlu0 0
      %462 = vperm.xlu0 %461, %v436
      %v463 = vpop.permute.xlu0 %462
      %466 = vset.pattern.permute.xlu0 0
      %467 = vperm.xlu0 %466, %v437
      %v468 = vpop.permute.xlu0 %467
      %471 = vset.pattern.permute.xlu0 0
      %472 = vperm.xlu0 %471, %v438
      %v473 = vpop.permute.xlu0 %472
      %476 = vset.pattern.permute.xlu0 0
      %477 = vperm.xlu0 %476, %v439
      %v478 = vpop.permute.xlu0 %477
      %v488 = vunpack.c.l.b16 %v382
      %v489 = vunpack.c.l.b16 %v383
      %v490 = vunpack.c.l.b16 %v384
      %v491 = vunpack.c.l.b16 %v385
      %v492 = vunpack.c.l.b16 %v386
      %v493 = vunpack.c.l.b16 %v387
      %v494 = vunpack.c.l.b16 %v388
      %v495 = vunpack.c.l.b16 %v389
      %v496 = vpack.c.b16 %v489, %v488
      %v497 = vpack.c.b16 %v491, %v490
      %v498 = vpack.c.b16 %v493, %v492
      %v499 = vpack.c.b16 %v495, %v494
      %506 = vrot.lane.b32.xlu0 %v426, 124
      %v507 = vpop.permute.xlu0 %506
      %508 = vrot.lane.b32.xlu0 %v427, 124
      %v509 = vpop.permute.xlu0 %508
      %510 = vrot.lane.b32.xlu0 %v428, 124
      %v511 = vpop.permute.xlu0 %510
      %512 = vrot.lane.b32.xlu0 %v429, 124
      %v513 = vpop.permute.xlu0 %512
      %514 = vrot.lane.b32.xlu0 %v430, 124
      %v515 = vpop.permute.xlu0 %514
      %516 = vrot.lane.b32.xlu0 %v431, 124
      %v517 = vpop.permute.xlu0 %516
      %vm518 = vcmask 1014784
      %v519 = vsel %vm518, %v507, %v509
      %v520 = vsel %vm518, %v511, %v513
      %v521 = vsel %vm518, %v515, %v517
      %vm524 = vcmask 326656
      %v526 = vsel %vm524, %v496, 0
      %v529 = vsel %vm524, %v497, 0
      %v532 = vsel %vm524, %v498, 0
      %v535 = vsel %vm524, %v499, 0
      %vm537 = vcmask 1043456
      %v539 = vsel %vm537, %v521, 0
      %541 = vmatprep.subr.bf16.mxu0 0
      %542 = vmatpush1.bf16.msra.mxu0 %v519
      %543 = vmatprep.subr.bf16.mxu0 0
      %544 = vmatpush1.bf16.msra.mxu0 %v520
      %545 = vmatprep.subr.bf16.mxu0 0
      %546 = vmatpush1.bf16.msra.mxu0 %v539
      %547 = vmatprep.subr.bf16.mxu0 0
      %548 = vmatpush1.bf16.msra.mxu0 0
      %549 = vmatprep.subr.bf16.mxu0 0
      %550 = vmatpush1.bf16.msra.mxu0 0
      %551 = vmatprep.subr.bf16.mxu0 0
      %552 = vmatpush1.bf16.msra.mxu0 0
      %553 = vmatprep.subr.bf16.mxu0 0
      %554 = vmatpush1.bf16.msra.mxu0 0
      %555 = vmatprep.subr.bf16.mxu0 0
      %556 = vmatpush1.bf16.msra.mxu0 0
      %557 = vmatprep.subr.bf16.mxu0 0
      %558 = vmatpush1.bf16.msra.mxu0 0
      %559 = vmatprep.subr.bf16.mxu0 0
      %560 = vmatpush1.bf16.msra.mxu0 0
      %561 = vmatprep.subr.bf16.mxu0 0
      %562 = vmatpush1.bf16.msra.mxu0 0
      %563 = vmatprep.subr.bf16.mxu0 0
      %564 = vmatpush1.bf16.msra.mxu0 0
      %565 = vmatprep.subr.bf16.mxu0 0
      %566 = vmatpush1.bf16.msra.mxu0 0
      %567 = vmatprep.subr.bf16.mxu0 0
      %568 = vmatpush1.bf16.msra.mxu0 0
      %569 = vmatprep.subr.bf16.mxu0 0
      %570 = vmatpush1.bf16.msra.mxu0 0
      %571 = vmatprep.subr.bf16.mxu0 0
      %572 = vmatpush1.bf16.msra.mxu0 0
      %573 = vmatprep.mubr.bf16.mxu0 0
      %574 = vmatmul.mubr.bf16.gmra.mrb[0].mxu0 %v526
      %v575 = vpop.f32.mrb[0].mxu0
      %v576 = vadd.f32 %v443, %v575
      %v577 = vpop.f32.mrb[0].mxu0
      %v578 = vpop.f32.mrb[0].mxu0
      %v579 = vadd.f32 %v448, %v578
      %v580 = vpop.f32.mrb[0].mxu0
      %581 = vmatprep.mubr.bf16.mxu0 0
      %582 = vmatmul.mubr.bf16.gmra.mrb[0].mxu0 %v529
      %v583 = vpop.f32.mrb[0].mxu0
      %v584 = vadd.f32 %v453, %v583
      %v585 = vpop.f32.mrb[0].mxu0
      %v586 = vpop.f32.mrb[0].mxu0
      %v587 = vadd.f32 %v458, %v586
      %v588 = vpop.f32.mrb[0].mxu0
      %589 = vmatprep.mubr.bf16.mxu0 0
      %590 = vmatmul.mubr.bf16.gmra.mrb[0].mxu0 %v532
      %v591 = vpop.f32.mrb[0].mxu0
      %v592 = vadd.f32 %v463, %v591
      %v593 = vpop.f32.mrb[0].mxu0
      %v594 = vpop.f32.mrb[0].mxu0
      %v595 = vadd.f32 %v468, %v594
      %v596 = vpop.f32.mrb[0].mxu0
      %597 = vmatprep.mubr.bf16.mxu0 0
      %598 = vmatmul.mubr.bf16.gmra.mrb[0].mxu0 %v535
      %v599 = vpop.f32.mrb[0].mxu0
      %v600 = vadd.f32 %v473, %v599
      %v601 = vpop.f32.mrb[0].mxu0
      %v602 = vpop.f32.mrb[0].mxu0
      %v603 = vadd.f32 %v478, %v602
      %v604 = vpop.f32.mrb[0].mxu0
      %605 = vdwg.mxu0
      %v606 = vmax.f32 %v576, 0.0
      %v607 = vmax.f32 %v579, 0.0
      %v608 = vmax.f32 %v584, 0.0
      %v609 = vmax.f32 %v587, 0.0
      %614 = vrot.lane.b32.xlu0 %v606, 8
      %v615 = vpop.permute.xlu0 %614
      %616 = vrot.lane.b32.xlu0 %v607, 8
      %v617 = vpop.permute.xlu0 %616
      %618 = vrot.lane.b32.xlu0 %v608, 8
      %v619 = vpop.permute.xlu0 %618
      %620 = vrot.lane.b32.xlu0 %v609, 8
      %v621 = vpop.permute.xlu0 %620
      %626 = vst.msk [vmem:[#allocation2] sm:$0xff] %vm379, %v615
      %627 = vst.msk [vmem:[#allocation2 + $0x8] sm:$0xff] %vm334, %v615
      %628 = vst.msk [vmem:[#allocation2 + $0x10] sm:$0xff] %vm379, %v617
      %629 = vst.msk [vmem:[#allocation2 + $0x18] sm:$0xff] %vm334, %v617
      %630 = vst.msk [vmem:[#allocation2 + $0x20] sm:$0xff] %vm379, %v619
      %631 = vst.msk [vmem:[#allocation2 + $0x28] sm:$0xff] %vm334, %v619
      %632 = vst.msk [vmem:[#allocation2 + $0x30] sm:$0xff] %vm379, %v621
      %633 = vst.msk [vmem:[#allocation2 + $0x38] sm:$0xff] %vm334, %v621
      %v634 = vld [vmem:[%s3] sm:$0xff]
      %v635 = vld [vmem:[%s3 + $0x8] sm:$0xff]
      %v636 = vld [vmem:[%s3 + $0x10] sm:$0xff]
      %v637 = vld [vmem:[%s3 + $0x18] sm:$0xff]
      %v638 = vld [vmem:[#allocation2] sm:$0xff]
      %v639 = vld [vmem:[#allocation2 + $0x8] sm:$0xff]
      %v640 = vld [vmem:[#allocation2 + $0x10] sm:$0xff]
      %v641 = vld [vmem:[#allocation2 + $0x18] sm:$0xff]
      %v642 = vld [vmem:[#allocation2 + $0x20] sm:$0xff]
      %v643 = vld [vmem:[#allocation2 + $0x28] sm:$0xff]
      %v644 = vld [vmem:[#allocation2 + $0x30] sm:$0xff]
      %v645 = vld [vmem:[#allocation2 + $0x38] sm:$0xff]
      %654 = vrot.lane.b32.xlu0 %v638, 127
      %v655 = vpop.permute.xlu0 %654
      %656 = vrot.lane.b32.xlu0 %v639, 127
      %v657 = vpop.permute.xlu0 %656
      %658 = vrot.lane.b32.xlu0 %v640, 127
      %v659 = vpop.permute.xlu0 %658
      %660 = vrot.lane.b32.xlu0 %v641, 127
      %v661 = vpop.permute.xlu0 %660
      %662 = vrot.lane.b32.xlu0 %v642, 127
      %v663 = vpop.permute.xlu0 %662
      %664 = vrot.lane.b32.xlu0 %v643, 127
      %v665 = vpop.permute.xlu0 %664
      %666 = vrot.lane.b32.xlu0 %v644, 127
      %v667 = vpop.permute.xlu0 %666
      %668 = vrot.lane.b32.xlu0 %v645, 127
      %v669 = vpop.permute.xlu0 %668
      %v670 = vsel %vm398, %v655, %v657
      %v671 = vsel %vm398, %v659, %v661
      %v672 = vsel %vm398, %v663, %v665
      %v673 = vsel %vm398, %v667, %v669
      %682 = vrot.lane.b32.xlu0 %v638, 126
      %v683 = vpop.permute.xlu0 %682
      %684 = vrot.lane.b32.xlu0 %v639, 126
      %v685 = vpop.permute.xlu0 %684
      %686 = vrot.lane.b32.xlu0 %v640, 126
      %v687 = vpop.permute.xlu0 %686
      %688 = vrot.lane.b32.xlu0 %v641, 126
      %v689 = vpop.permute.xlu0 %688
      %690 = vrot.lane.b32.xlu0 %v642, 126
      %v691 = vpop.permute.xlu0 %690
      %692 = vrot.lane.b32.xlu0 %v643, 126
      %v693 = vpop.permute.xlu0 %692
      %694 = vrot.lane.b32.xlu0 %v644, 126
      %v695 = vpop.permute.xlu0 %694
      %696 = vrot.lane.b32.xlu0 %v645, 126
      %v697 = vpop.permute.xlu0 %696
      %v698 = vsel %vm406, %v683, %v685
      %v699 = vsel %vm406, %v687, %v689
      %v700 = vsel %vm406, %v691, %v693
      %v701 = vsel %vm406, %v695, %v697
      %710 = vrot.lane.b32.xlu0 %v638, 125
      %v711 = vpop.permute.xlu0 %710
      %712 = vrot.lane.b32.xlu0 %v639, 125
      %v713 = vpop.permute.xlu0 %712
      %714 = vrot.lane.b32.xlu0 %v640, 125
      %v715 = vpop.permute.xlu0 %714
      %716 = vrot.lane.b32.xlu0 %v641, 125
      %v717 = vpop.permute.xlu0 %716
      %718 = vrot.lane.b32.xlu0 %v642, 125
      %v719 = vpop.permute.xlu0 %718
      %720 = vrot.lane.b32.xlu0 %v643, 125
      %v721 = vpop.permute.xlu0 %720
      %722 = vrot.lane.b32.xlu0 %v644, 125
      %v723 = vpop.permute.xlu0 %722
      %724 = vrot.lane.b32.xlu0 %v645, 125
      %v725 = vpop.permute.xlu0 %724
      %v726 = vsel %vm414, %v711, %v713
      %v727 = vsel %vm414, %v715, %v717
      %v728 = vsel %vm414, %v719, %v721
      %v729 = vsel %vm414, %v723, %v725
      %738 = vrot.lane.b32.xlu0 %v638, 124
      %v739 = vpop.permute.xlu0 %738
      %740 = vrot.lane.b32.xlu0 %v639, 124
      %v741 = vpop.permute.xlu0 %740
      %742 = vrot.lane.b32.xlu0 %v640, 124
      %v743 = vpop.permute.xlu0 %742
      %744 = vrot.lane.b32.xlu0 %v641, 124
      %v745 = vpop.permute.xlu0 %744
      %746 = vrot.lane.b32.xlu0 %v642, 124
      %v747 = vpop.permute.xlu0 %746
      %748 = vrot.lane.b32.xlu0 %v643, 124
      %v749 = vpop.permute.xlu0 %748
      %750 = vrot.lane.b32.xlu0 %v644, 124
      %v751 = vpop.permute.xlu0 %750
      %752 = vrot.lane.b32.xlu0 %v645, 124
      %v753 = vpop.permute.xlu0 %752
      %v754 = vsel %vm422, %v739, %v741
      %v755 = vsel %vm422, %v743, %v745
      %v756 = vsel %vm422, %v747, %v749
      %v757 = vsel %vm422, %v751, %v753
      %v766 = vpack.c.bf16 %v640, %v638
      %v767 = vpack.c.bf16 %v641, %v639
      %v768 = vpack.c.bf16 %v644, %v642
      %v769 = vpack.c.bf16 %v645, %v643
      %v770 = vpack.c.bf16 %v671, %v670
      %v771 = vpack.c.bf16 %v661, %v657
      %v772 = vpack.c.bf16 %v673, %v672
      %v773 = vpack.c.bf16 %v669, %v665
      %v774 = vpack.c.bf16 %v699, %v698
      %v775 = vpack.c.bf16 %v689, %v685
      %v776 = vpack.c.bf16 %v701, %v700
      %v777 = vpack.c.bf16 %v697, %v693
      %v778 = vpack.c.bf16 %v727, %v726
      %v779 = vpack.c.bf16 %v717, %v713
      %v780 = vpack.c.bf16 %v729, %v728
      %v781 = vpack.c.bf16 %v725, %v721
      %v782 = vpack.c.bf16 %v755, %v754
      %v783 = vpack.c.bf16 %v745, %v741
      %v784 = vpack.c.bf16 %v757, %v756
      %v785 = vpack.c.bf16 %v753, %v749
      %v786 = vld [vmem:[%s4] sm:$0xff]
      %v787 = vld [vmem:[%s4 + $0x8] sm:$0xff]
      %v788 = vld [vmem:[%s4 + $0x10] sm:$0xff]
      %v789 = vld [vmem:[%s4 + $0x18] sm:$0xff]
      %791 = vset.pattern.permute.xlu0 0
      %792 = vperm.xlu0 %791, %v786
      %v793 = vpop.permute.xlu0 %792
      %796 = vset.pattern.permute.xlu0 0
      %797 = vperm.xlu0 %796, %v787
      %v798 = vpop.permute.xlu0 %797
      %801 = vset.pattern.permute.xlu0 0
      %802 = vperm.xlu0 %801, %v788
      %v803 = vpop.permute.xlu0 %802
      %806 = vset.pattern.permute.xlu0 0
      %807 = vperm.xlu0 %806, %v789
      %v808 = vpop.permute.xlu0 %807
      %v814 = vunpack.c.l.b16 %v634
      %v815 = vunpack.c.h.b16 %v634
      %v816 = vunpack.c.l.b16 %v635
      %v817 = vunpack.c.h.b16 %v635
      %v818 = vunpack.c.l.b16 %v636
      %v819 = vunpack.c.h.b16 %v636
      %v820 = vunpack.c.l.b16 %v637
      %v821 = vunpack.c.h.b16 %v637
      %v822 = vpack.c.b16 %v816, %v814
      %v823 = vpack.c.b16 %v817, %v815
      %v824 = vpack.c.b16 %v820, %v818
      %v825 = vpack.c.b16 %v821, %v819
      %848 = vrot.lane.b32.xlu0 %v766, 124
      %v849 = vpop.permute.xlu0 %848
      %850 = vrot.lane.b32.xlu0 %v767, 124
      %v851 = vpop.permute.xlu0 %850
      %852 = vrot.lane.b32.xlu0 %v768, 124
      %v853 = vpop.permute.xlu0 %852
      %854 = vrot.lane.b32.xlu0 %v769, 124
      %v855 = vpop.permute.xlu0 %854
      %856 = vrot.lane.b32.xlu0 %v770, 124
      %v857 = vpop.permute.xlu0 %856
      %858 = vrot.lane.b32.xlu0 %v771, 124
      %v859 = vpop.permute.xlu0 %858
      %860 = vrot.lane.b32.xlu0 %v772, 124
      %v861 = vpop.permute.xlu0 %860
      %862 = vrot.lane.b32.xlu0 %v773, 124
      %v863 = vpop.permute.xlu0 %862
      %864 = vrot.lane.b32.xlu0 %v774, 124
      %v865 = vpop.permute.xlu0 %864
      %866 = vrot.lane.b32.xlu0 %v775, 124
      %v867 = vpop.permute.xlu0 %866
      %868 = vrot.lane.b32.xlu0 %v776, 124
      %v869 = vpop.permute.xlu0 %868
      %870 = vrot.lane.b32.xlu0 %v777, 124
      %v871 = vpop.permute.xlu0 %870
      %872 = vrot.lane.b32.xlu0 %v778, 124
      %v873 = vpop.permute.xlu0 %872
      %874 = vrot.lane.b32.xlu0 %v779, 124
      %v875 = vpop.permute.xlu0 %874
      %876 = vrot.lane.b32.xlu0 %v780, 124
      %v877 = vpop.permute.xlu0 %876
      %878 = vrot.lane.b32.xlu0 %v781, 124
      %v879 = vpop.permute.xlu0 %878
      %880 = vrot.lane.b32.xlu0 %v782, 124
      %v881 = vpop.permute.xlu0 %880
      %882 = vrot.lane.b32.xlu0 %v783, 124
      %v883 = vpop.permute.xlu0 %882
      %884 = vrot.lane.b32.xlu0 %v784, 124
      %v885 = vpop.permute.xlu0 %884
      %886 = vrot.lane.b32.xlu0 %v785, 124
      %v887 = vpop.permute.xlu0 %886
      %v888 = vsel %vm518, %v849, %v851
      %v889 = vsel %vm518, %v853, %v855
      %v890 = vsel %vm518, %v857, %v859
      %v891 = vsel %vm518, %v861, %v863
      %v892 = vsel %vm518, %v865, %v867
      %v893 = vsel %vm518, %v869, %v871
      %v894 = vsel %vm518, %v873, %v875
      %v895 = vsel %vm518, %v877, %v879
      %v896 = vsel %vm518, %v881, %v883
      %v897 = vsel %vm518, %v885, %v887
      %vm908 = vcmask 261120
      %v910 = vsel %vm908, %v823, 0
      %v913 = vsel %vm908, %v825, 0
      %915 = vmatprep.subr.bf16.mxu0 0
      %916 = vmatpush1.bf16.msra.mxu0 %v888
      %917 = vmatprep.subr.bf16.mxu0 0
      %918 = vmatpush1.bf16.msra.mxu0 %v889
      %919 = vmatprep.subr.bf16.mxu0 0
      %920 = vmatpush1.bf16.msra.mxu0 %v890
      %921 = vmatprep.subr.bf16.mxu0 0
      %922 = vmatpush1.bf16.msra.mxu0 %v891
      %923 = vmatprep.subr.bf16.mxu0 0
      %924 = vmatpush1.bf16.msra.mxu0 %v892
      %925 = vmatprep.subr.bf16.mxu0 0
      %926 = vmatpush1.bf16.msra.mxu0 %v893
      %927 = vmatprep.subr.bf16.mxu0 0
      %928 = vmatpush1.bf16.msra.mxu0 %v894
      %929 = vmatprep.subr.bf16.mxu0 0
      %930 = vmatpush1.bf16.msra.mxu0 %v895
      %931 = vmatprep.subr.bf16.mxu0 0
      %932 = vmatpush1.bf16.msra.mxu0 %v896
      %933 = vmatprep.subr.bf16.mxu0 0
      %934 = vmatpush1.bf16.msra.mxu0 %v897
      %935 = vmatprep.subr.bf16.mxu0 0
      %936 = vmatpush1.bf16.msra.mxu0 0
      %937 = vmatprep.subr.bf16.mxu0 0
      %938 = vmatpush1.bf16.msra.mxu0 0
      %939 = vmatprep.subr.bf16.mxu0 0
      %940 = vmatpush1.bf16.msra.mxu0 0
      %941 = vmatprep.subr.bf16.mxu0 0
      %942 = vmatpush1.bf16.msra.mxu0 0
      %943 = vmatprep.subr.bf16.mxu0 0
      %944 = vmatpush1.bf16.msra.mxu0 0
      %945 = vmatprep.subr.bf16.mxu0 0
      %946 = vmatpush1.bf16.msra.mxu0 0
      %947 = vmatprep.mubr.bf16.mxu0 %v910
      %948 = vmatmul.mubr.bf16.gmra.mrb[0].mxu0 %v822
      %v949 = vpop.f32.mrb[0].mxu0
      %v950 = vadd.f32 %v793, %v949
      %v951 = vpop.f32.mrb[0].mxu0
      %v952 = vpop.f32.mrb[0].mxu0
      %v953 = vadd.f32 %v798, %v952
      %v954 = vpop.f32.mrb[0].mxu0
      %955 = vmatprep.mubr.bf16.mxu0 %v913
      %956 = vmatmul.mubr.bf16.gmra.mrb[0].mxu0 %v824
      %v957 = vpop.f32.mrb[0].mxu0
      %v958 = vadd.f32 %v803, %v957
      %v959 = vpop.f32.mrb[0].mxu0
      %v960 = vpop.f32.mrb[0].mxu0
      %v961 = vadd.f32 %v808, %v960
      %v962 = vpop.f32.mrb[0].mxu0
      %963 = vdwg.mxu0
      %v964 = vmax.f32 %v950, 0.0
      %v965 = vmax.f32 %v953, 0.0
      %v966 = vmax.f32 %v958, 0.0
      %v967 = vmax.f32 %v961, 0.0
      %v968 = vadd.f32 %v964, %v592
      %v969 = vadd.f32 %v965, %v595
      %v970 = vadd.f32 %v966, %v600
      %v971 = vadd.f32 %v967, %v603
      %v972 = vmax.f32 %v968, 0.0
      %v973 = vmax.f32 %v969, 0.0
      %v974 = vmax.f32 %v970, 0.0
      %v975 = vmax.f32 %v971, 0.0
      %980 = vrot.lane.b32.xlu0 %v972, 8
      %v981 = vpop.permute.xlu0 %980
      %982 = vrot.lane.b32.xlu0 %v973, 8
      %v983 = vpop.permute.xlu0 %982
      %984 = vrot.lane.b32.xlu0 %v974, 8
      %v985 = vpop.permute.xlu0 %984
      %986 = vrot.lane.b32.xlu0 %v975, 8
      %v987 = vpop.permute.xlu0 %986
      %992 = vst.msk [vmem:[#allocation2] sm:$0xff] %vm379, %v981
      %993 = vst.msk [vmem:[#allocation2 + $0x8] sm:$0xff] %vm334, %v981
      %994 = vst.msk [vmem:[#allocation2 + $0x10] sm:$0xff] %vm379, %v983
      %995 = vst.msk [vmem:[#allocation2 + $0x18] sm:$0xff] %vm334, %v983
      %996 = vst.msk [vmem:[#allocation2 + $0x20] sm:$0xff] %vm379, %v985
      %997 = vst.msk [vmem:[#allocation2 + $0x28] sm:$0xff] %vm334, %v985
      %998 = vst.msk [vmem:[#allocation2 + $0x30] sm:$0xff] %vm379, %v987
      %999 = vst.msk [vmem:[#allocation2 + $0x38] sm:$0xff] %vm334, %v987
      %v1000 = vld [vmem:[%s5] sm:$0xff]
      %v1001 = vld [vmem:[%s5 + $0x8] sm:$0xff]
      %v1002 = vld [vmem:[%s5 + $0x10] sm:$0xff]
      %v1003 = vld [vmem:[%s5 + $0x18] sm:$0xff]
      %v1004 = vld [vmem:[#allocation2] sm:$0xff]
      %v1005 = vld [vmem:[#allocation2 + $0x10] sm:$0xff]
      %v1006 = vld [vmem:[#allocation2 + $0x20] sm:$0xff]
      %v1007 = vld [vmem:[#allocation2 + $0x30] sm:$0xff]
      %v1008 = vld [vmem:[#allocation2 + $0x8] sm:$0xff]
      %v1009 = vld [vmem:[#allocation2 + $0x18] sm:$0xff]
      %v1010 = vld [vmem:[#allocation2 + $0x28] sm:$0xff]
      %v1011 = vld [vmem:[#allocation2 + $0x38] sm:$0xff]
      %1020 = vrot.lane.b32.xlu0 %v1004, 126
      %v1021 = vpop.permute.xlu0 %1020
      %1022 = vrot.lane.b32.xlu0 %v1008, 126
      %v1023 = vpop.permute.xlu0 %1022
      %1024 = vrot.lane.b32.xlu0 %v1005, 126
      %v1025 = vpop.permute.xlu0 %1024
      %1026 = vrot.lane.b32.xlu0 %v1009, 126
      %v1027 = vpop.permute.xlu0 %1026
      %1028 = vrot.lane.b32.xlu0 %v1006, 126
      %v1029 = vpop.permute.xlu0 %1028
      %1030 = vrot.lane.b32.xlu0 %v1010, 126
      %v1031 = vpop.permute.xlu0 %1030
      %1032 = vrot.lane.b32.xlu0 %v1007, 126
      %v1033 = vpop.permute.xlu0 %1032
      %1034 = vrot.lane.b32.xlu0 %v1011, 126
      %v1035 = vpop.permute.xlu0 %1034
      %v1036 = vsel %vm406, %v1021, %v1023
      %v1037 = vsel %vm406, %v1025, %v1027
      %v1038 = vsel %vm406, %v1029, %v1031
      %v1039 = vsel %vm406, %v1033, %v1035
      %1044 = vrot.lane.b32.xlu0 %v1004, 124
      %v1045 = vpop.permute.xlu0 %1044
      %1046 = vrot.lane.b32.xlu0 %v1008, 124
      %v1047 = vpop.permute.xlu0 %1046
      %1048 = vrot.lane.b32.xlu0 %v1005, 124
      %v1049 = vpop.permute.xlu0 %1048
      %1050 = vrot.lane.b32.xlu0 %v1009, 124
      %v1051 = vpop.permute.xlu0 %1050
      %1052 = vrot.lane.b32.xlu0 %v1006, 124
      %v1053 = vpop.permute.xlu0 %1052
      %1054 = vrot.lane.b32.xlu0 %v1010, 124
      %v1055 = vpop.permute.xlu0 %1054
      %1056 = vrot.lane.b32.xlu0 %v1007, 124
      %v1057 = vpop.permute.xlu0 %1056
      %1058 = vrot.lane.b32.xlu0 %v1011, 124
      %v1059 = vpop.permute.xlu0 %1058
      %v1060 = vsel %vm422, %v1045, %v1047
      %v1061 = vsel %vm422, %v1049, %v1051
      %v1062 = vsel %vm422, %v1053, %v1055
      %v1063 = vsel %vm422, %v1057, %v1059
      %1068 = vrot.lane.b32.xlu0 %v1004, 122
      %v1069 = vpop.permute.xlu0 %1068
      %1070 = vrot.lane.b32.xlu0 %v1008, 122
      %v1071 = vpop.permute.xlu0 %1070
      %1072 = vrot.lane.b32.xlu0 %v1005, 122
      %v1073 = vpop.permute.xlu0 %1072
      %1074 = vrot.lane.b32.xlu0 %v1009, 122
      %v1075 = vpop.permute.xlu0 %1074
      %1076 = vrot.lane.b32.xlu0 %v1006, 122
      %v1077 = vpop.permute.xlu0 %1076
      %1078 = vrot.lane.b32.xlu0 %v1010, 122
      %v1079 = vpop.permute.xlu0 %1078
      %1080 = vrot.lane.b32.xlu0 %v1007, 122
      %v1081 = vpop.permute.xlu0 %1080
      %1082 = vrot.lane.b32.xlu0 %v1011, 122
      %v1083 = vpop.permute.xlu0 %1082
      %vm1084 = vcmask 998400
      %v1085 = vsel %vm1084, %v1069, %v1071
      %v1086 = vsel %vm1084, %v1073, %v1075
      %v1087 = vsel %vm1084, %v1077, %v1079
      %v1088 = vsel %vm1084, %v1081, %v1083
      %1093 = vrot.lane.b32.xlu0 %v1004, 120
      %v1094 = vpop.permute.xlu0 %1093
      %1095 = vrot.lane.b32.xlu0 %v1008, 120
      %v1096 = vpop.permute.xlu0 %1095
      %1097 = vrot.lane.b32.xlu0 %v1005, 120
      %v1098 = vpop.permute.xlu0 %1097
      %1099 = vrot.lane.b32.xlu0 %v1009, 120
      %v1100 = vpop.permute.xlu0 %1099
      %1101 = vrot.lane.b32.xlu0 %v1006, 120
      %v1102 = vpop.permute.xlu0 %1101
      %1103 = vrot.lane.b32.xlu0 %v1010, 120
      %v1104 = vpop.permute.xlu0 %1103
      %1105 = vrot.lane.b32.xlu0 %v1007, 120
      %v1106 = vpop.permute.xlu0 %1105
      %1107 = vrot.lane.b32.xlu0 %v1011, 120
      %v1108 = vpop.permute.xlu0 %1107
      %vm1109 = vcmask 982016
      %v1110 = vsel %vm1109, %v1094, %v1096
      %v1111 = vsel %vm1109, %v1098, %v1100
      %v1112 = vsel %vm1109, %v1102, %v1104
      %v1113 = vsel %vm1109, %v1106, %v1108
      %v1118 = vpack.c.bf16 %v1005, %v1004
      %v1119 = vpack.c.bf16 %v1007, %v1006
      %v1120 = vpack.c.bf16 %v1037, %v1036
      %v1121 = vpack.c.bf16 %v1039, %v1038
      %v1122 = vpack.c.bf16 %v1061, %v1060
      %v1123 = vpack.c.bf16 %v1063, %v1062
      %v1124 = vpack.c.bf16 %v1086, %v1085
      %v1125 = vpack.c.bf16 %v1088, %v1087
      %v1126 = vpack.c.bf16 %v1111, %v1110
      %v1127 = vpack.c.bf16 %v1113, %v1112
      %v1128 = vld [vmem:[%s6] sm:$0xff]
      %v1129 = vld [vmem:[%s6 + $0x8] sm:$0xff]
      %v1130 = vld [vmem:[%s6 + $0x10] sm:$0xff]
      %v1131 = vld [vmem:[%s6 + $0x18] sm:$0xff]
      %1133 = vset.pattern.permute.xlu0 0
      %1134 = vperm.xlu0 %1133, %v1128
      %v1135 = vpop.permute.xlu0 %1134
      %1138 = vset.pattern.permute.xlu0 0
      %1139 = vperm.xlu0 %1138, %v1129
      %v1140 = vpop.permute.xlu0 %1139
      %1143 = vset.pattern.permute.xlu0 0
      %1144 = vperm.xlu0 %1143, %v1130
      %v1145 = vpop.permute.xlu0 %1144
      %1148 = vset.pattern.permute.xlu0 0
      %1149 = vperm.xlu0 %1148, %v1131
      %v1150 = vpop.permute.xlu0 %1149
      %v1156 = vunpack.c.l.b16 %v1000
      %v1157 = vunpack.c.h.b16 %v1000
      %v1158 = vunpack.c.l.b16 %v1001
      %v1159 = vunpack.c.h.b16 %v1001
      %v1160 = vunpack.c.l.b16 %v1002
      %v1161 = vunpack.c.h.b16 %v1002
      %v1162 = vunpack.c.l.b16 %v1003
      %v1163 = vunpack.c.h.b16 %v1003
      %v1164 = vpack.c.b16 %v1158, %v1156
      %v1165 = vpack.c.b16 %v1159, %v1157
      %v1166 = vpack.c.b16 %v1162, %v1160
      %v1167 = vpack.c.b16 %v1163, %v1161
      %v1171 = vsel %vm908, %v1165, 0
      %v1174 = vsel %vm908, %v1167, 0
      %1176 = vmatprep.subr.bf16.mxu0 0
      %1177 = vmatpush1.bf16.msra.mxu0 %v1118
      %1178 = vmatprep.subr.bf16.mxu0 0
      %1179 = vmatpush1.bf16.msra.mxu0 %v1119
      %1180 = vmatprep.subr.bf16.mxu0 0
      %1181 = vmatpush1.bf16.msra.mxu0 %v1120
      %1182 = vmatprep.subr.bf16.mxu0 0
      %1183 = vmatpush1.bf16.msra.mxu0 %v1121
      %1184 = vmatprep.subr.bf16.mxu0 0
      %1185 = vmatpush1.bf16.msra.mxu0 %v1122
      %1186 = vmatprep.subr.bf16.mxu0 0
      %1187 = vmatpush1.bf16.msra.mxu0 %v1123
      %1188 = vmatprep.subr.bf16.mxu0 0
      %1189 = vmatpush1.bf16.msra.mxu0 %v1124
      %1190 = vmatprep.subr.bf16.mxu0 0
      %1191 = vmatpush1.bf16.msra.mxu0 %v1125
      %1192 = vmatprep.subr.bf16.mxu0 0
      %1193 = vmatpush1.bf16.msra.mxu0 %v1126
      %1194 = vmatprep.subr.bf16.mxu0 0
      %1195 = vmatpush1.bf16.msra.mxu0 %v1127
      %1196 = vmatprep.subr.bf16.mxu0 0
      %1197 = vmatpush1.bf16.msra.mxu0 0
      %1198 = vmatprep.subr.bf16.mxu0 0
      %1199 = vmatpush1.bf16.msra.mxu0 0
      %1200 = vmatprep.subr.bf16.mxu0 0
      %1201 = vmatpush1.bf16.msra.mxu0 0
      %1202 = vmatprep.subr.bf16.mxu0 0
      %1203 = vmatpush1.bf16.msra.mxu0 0
      %1204 = vmatprep.subr.bf16.mxu0 0
      %1205 = vmatpush1.bf16.msra.mxu0 0
      %1206 = vmatprep.subr.bf16.mxu0 0
      %1207 = vmatpush1.bf16.msra.mxu0 0
      %1208 = vmatprep.mubr.bf16.mxu0 %v1171
      %1209 = vmatmul.mubr.bf16.gmra.mrb[0].mxu0 %v1164
      %v1210 = vpop.f32.mrb[0].mxu0
      %v1211 = vadd.f32 %v1135, %v1210
      %v1212 = vpop.f32.mrb[0].mxu0
      %v1213 = vpop.f32.mrb[0].mxu0
      %v1214 = vadd.f32 %v1140, %v1213
      %v1215 = vpop.f32.mrb[0].mxu0
      %1216 = vmatprep.mubr.bf16.mxu0 %v1174
      %1217 = vmatmul.mubr.bf16.gmra.mrb[0].mxu0 %v1166
      %v1218 = vpop.f32.mrb[0].mxu0
      %v1219 = vadd.f32 %v1145, %v1218
      %v1220 = vpop.f32.mrb[0].mxu0
      %v1221 = vpop.f32.mrb[0].mxu0
      %v1222 = vadd.f32 %v1150, %v1221
      %v1223 = vpop.f32.mrb[0].mxu0
      %1224 = vdwg.mxu0
      %v1225 = vmax.f32 %v1211, 0.0
      %v1226 = vmax.f32 %v1214, 0.0
      %v1227 = vmax.f32 %v1219, 0.0
      %v1228 = vmax.f32 %v1222, 0.0
      %1233 = vrot.lane.b32.xlu0 %v1225, 8
      %v1234 = vpop.permute.xlu0 %1233
      %1235 = vrot.lane.b32.xlu0 %v1226, 8
      %v1236 = vpop.permute.xlu0 %1235
      %1237 = vrot.lane.b32.xlu0 %v1227, 8
      %v1238 = vpop.permute.xlu0 %1237
      %1239 = vrot.lane.b32.xlu0 %v1228, 8
      %v1240 = vpop.permute.xlu0 %1239
      %1245 = vst.msk [vmem:[#allocation2] sm:$0xff] %vm379, %v1234
      %1246 = vst.msk [vmem:[#allocation2 + $0x8] sm:$0xff] %vm334, %v1234
      %1247 = vst.msk [vmem:[#allocation2 + $0x10] sm:$0xff] %vm379, %v1236
      %1248 = vst.msk [vmem:[#allocation2 + $0x18] sm:$0xff] %vm334, %v1236
      %1249 = vst.msk [vmem:[#allocation2 + $0x20] sm:$0xff] %vm379, %v1238
      %1250 = vst.msk [vmem:[#allocation2 + $0x28] sm:$0xff] %vm334, %v1238
      %1251 = vst.msk [vmem:[#allocation2 + $0x30] sm:$0xff] %vm379, %v1240
      %1252 = vst.msk [vmem:[#allocation2 + $0x38] sm:$0xff] %vm334, %v1240
      %v1253 = vld [vmem:[%s7] sm:$0xff]
      %v1254 = vld [vmem:[%s7 + $0x8] sm:$0xff]
      %v1255 = vld [vmem:[%s7 + $0x10] sm:$0xff]
      %v1256 = vld [vmem:[%s7 + $0x18] sm:$0xff]
      %v1257 = vld [vmem:[#allocation2] sm:$0xff]
      %v1258 = vld [vmem:[#allocation2 + $0x10] sm:$0xff]
      %v1259 = vld [vmem:[#allocation2 + $0x20] sm:$0xff]
      %v1260 = vld [vmem:[#allocation2 + $0x30] sm:$0xff]
      %v1261 = vld [vmem:[#allocation2 + $0x8] sm:$0xff]
      %v1262 = vld [vmem:[#allocation2 + $0x18] sm:$0xff]
      %v1263 = vld [vmem:[#allocation2 + $0x28] sm:$0xff]
      %v1264 = vld [vmem:[#allocation2 + $0x38] sm:$0xff]
      %1273 = vrot.lane.b32.xlu0 %v1257, 126
      %v1274 = vpop.permute.xlu0 %1273
      %1275 = vrot.lane.b32.xlu0 %v1261, 126
      %v1276 = vpop.permute.xlu0 %1275
      %1277 = vrot.lane.b32.xlu0 %v1258, 126
      %v1278 = vpop.permute.xlu0 %1277
      %1279 = vrot.lane.b32.xlu0 %v1262, 126
      %v1280 = vpop.permute.xlu0 %1279
      %1281 = vrot.lane.b32.xlu0 %v1259, 126
      %v1282 = vpop.permute.xlu0 %1281
      %1283 = vrot.lane.b32.xlu0 %v1263, 126
      %v1284 = vpop.permute.xlu0 %1283
      %1285 = vrot.lane.b32.xlu0 %v1260, 126
      %v1286 = vpop.permute.xlu0 %1285
      %1287 = vrot.lane.b32.xlu0 %v1264, 126
      %v1288 = vpop.permute.xlu0 %1287
      %v1289 = vsel %vm406, %v1274, %v1276
      %v1290 = vsel %vm406, %v1278, %v1280
      %v1291 = vsel %vm406, %v1282, %v1284
      %v1292 = vsel %vm406, %v1286, %v1288
      %1297 = vrot.lane.b32.xlu0 %v1257, 124
      %v1298 = vpop.permute.xlu0 %1297
      %1299 = vrot.lane.b32.xlu0 %v1261, 124
      %v1300 = vpop.permute.xlu0 %1299
      %1301 = vrot.lane.b32.xlu0 %v1258, 124
      %v1302 = vpop.permute.xlu0 %1301
      %1303 = vrot.lane.b32.xlu0 %v1262, 124
      %v1304 = vpop.permute.xlu0 %1303
      %1305 = vrot.lane.b32.xlu0 %v1259, 124
      %v1306 = vpop.permute.xlu0 %1305
      %1307 = vrot.lane.b32.xlu0 %v1263, 124
      %v1308 = vpop.permute.xlu0 %1307
      %1309 = vrot.lane.b32.xlu0 %v1260, 124
      %v1310 = vpop.permute.xlu0 %1309
      %1311 = vrot.lane.b32.xlu0 %v1264, 124
      %v1312 = vpop.permute.xlu0 %1311
      %v1313 = vsel %vm422, %v1298, %v1300
      %v1314 = vsel %vm422, %v1302, %v1304
      %v1315 = vsel %vm422, %v1306, %v1308
      %v1316 = vsel %vm422, %v1310, %v1312
      %1321 = vrot.lane.b32.xlu0 %v1257, 122
      %v1322 = vpop.permute.xlu0 %1321
      %1323 = vrot.lane.b32.xlu0 %v1261, 122
      %v1324 = vpop.permute.xlu0 %1323
      %1325 = vrot.lane.b32.xlu0 %v1258, 122
      %v1326 = vpop.permute.xlu0 %1325
      %1327 = vrot.lane.b32.xlu0 %v1262, 122
      %v1328 = vpop.permute.xlu0 %1327
      %1329 = vrot.lane.b32.xlu0 %v1259, 122
      %v1330 = vpop.permute.xlu0 %1329
      %1331 = vrot.lane.b32.xlu0 %v1263, 122
      %v1332 = vpop.permute.xlu0 %1331
      %1333 = vrot.lane.b32.xlu0 %v1260, 122
      %v1334 = vpop.permute.xlu0 %1333
      %1335 = vrot.lane.b32.xlu0 %v1264, 122
      %v1336 = vpop.permute.xlu0 %1335
      %v1337 = vsel %vm1084, %v1322, %v1324
      %v1338 = vsel %vm1084, %v1326, %v1328
      %v1339 = vsel %vm1084, %v1330, %v1332
      %v1340 = vsel %vm1084, %v1334, %v1336
      %1345 = vrot.lane.b32.xlu0 %v1257, 120
      %v1346 = vpop.permute.xlu0 %1345
      %1347 = vrot.lane.b32.xlu0 %v1261, 120
      %v1348 = vpop.permute.xlu0 %1347
      %1349 = vrot.lane.b32.xlu0 %v1258, 120
      %v1350 = vpop.permute.xlu0 %1349
      %1351 = vrot.lane.b32.xlu0 %v1262, 120
      %v1352 = vpop.permute.xlu0 %1351
      %1353 = vrot.lane.b32.xlu0 %v1259, 120
      %v1354 = vpop.permute.xlu0 %1353
      %1355 = vrot.lane.b32.xlu0 %v1263, 120
      %v1356 = vpop.permute.xlu0 %1355
      %1357 = vrot.lane.b32.xlu0 %v1260, 120
      %v1358 = vpop.permute.xlu0 %1357
      %1359 = vrot.lane.b32.xlu0 %v1264, 120
      %v1360 = vpop.permute.xlu0 %1359
      %v1361 = vsel %vm1109, %v1346, %v1348
      %v1362 = vsel %vm1109, %v1350, %v1352
      %v1363 = vsel %vm1109, %v1354, %v1356
      %v1364 = vsel %vm1109, %v1358, %v1360
      %v1369 = vpack.c.bf16 %v1258, %v1257
      %v1370 = vpack.c.bf16 %v1260, %v1259
      %v1371 = vpack.c.bf16 %v1290, %v1289
      %v1372 = vpack.c.bf16 %v1292, %v1291
      %v1373 = vpack.c.bf16 %v1314, %v1313
      %v1374 = vpack.c.bf16 %v1316, %v1315
      %v1375 = vpack.c.bf16 %v1338, %v1337
      %v1376 = vpack.c.bf16 %v1340, %v1339
      %v1377 = vpack.c.bf16 %v1362, %v1361
      %v1378 = vpack.c.bf16 %v1364, %v1363
      %v1379 = vld [vmem:[%s8] sm:$0xff]
      %v1380 = vld [vmem:[%s8 + $0x8] sm:$0xff]
      %v1381 = vld [vmem:[%s8 + $0x10] sm:$0xff]
      %v1382 = vld [vmem:[%s8 + $0x18] sm:$0xff]
      %1384 = vset.pattern.permute.xlu0 0
      %1385 = vperm.xlu0 %1384, %v1379
      %v1386 = vpop.permute.xlu0 %1385
      %1389 = vset.pattern.permute.xlu0 0
      %1390 = vperm.xlu0 %1389, %v1380
      %v1391 = vpop.permute.xlu0 %1390
      %1394 = vset.pattern.permute.xlu0 0
      %1395 = vperm.xlu0 %1394, %v1381
      %v1396 = vpop.permute.xlu0 %1395
      %1399 = vset.pattern.permute.xlu0 0
      %1400 = vperm.xlu0 %1399, %v1382
      %v1401 = vpop.permute.xlu0 %1400
      %v1407 = vunpack.c.l.b16 %v1253
      %v1408 = vunpack.c.h.b16 %v1253
      %v1409 = vunpack.c.l.b16 %v1254
      %v1410 = vunpack.c.h.b16 %v1254
      %v1411 = vunpack.c.l.b16 %v1255
      %v1412 = vunpack.c.h.b16 %v1255
      %v1413 = vunpack.c.l.b16 %v1256
      %v1414 = vunpack.c.h.b16 %v1256
      %v1415 = vpack.c.b16 %v1409, %v1407
      %v1416 = vpack.c.b16 %v1410, %v1408
      %v1417 = vpack.c.b16 %v1413, %v1411
      %v1418 = vpack.c.b16 %v1414, %v1412
      %v1422 = vsel %vm908, %v1416, 0
      %v1425 = vsel %vm908, %v1418, 0
      %1427 = vmatprep.subr.bf16.mxu0 0
      %1428 = vmatpush1.bf16.msra.mxu0 %v1369
      %1429 = vmatprep.subr.bf16.mxu0 0
      %1430 = vmatpush1.bf16.msra.mxu0 %v1370
      %1431 = vmatprep.subr.bf16.mxu0 0
      %1432 = vmatpush1.bf16.msra.mxu0 %v1371
      %1433 = vmatprep.subr.bf16.mxu0 0
      %1434 = vmatpush1.bf16.msra.mxu0 %v1372
      %1435 = vmatprep.subr.bf16.mxu0 0
      %1436 = vmatpush1.bf16.msra.mxu0 %v1373
      %1437 = vmatprep.subr.bf16.mxu0 0
      %1438 = vmatpush1.bf16.msra.mxu0 %v1374
      %1439 = vmatprep.subr.bf16.mxu0 0
      %1440 = vmatpush1.bf16.msra.mxu0 %v1375
      %1441 = vmatprep.subr.bf16.mxu0 0
      %1442 = vmatpush1.bf16.msra.mxu0 %v1376
      %1443 = vmatprep.subr.bf16.mxu0 0
      %1444 = vmatpush1.bf16.msra.mxu0 %v1377
      %1445 = vmatprep.subr.bf16.mxu0 0
      %1446 = vmatpush1.bf16.msra.mxu0 %v1378
      %1447 = vmatprep.subr.bf16.mxu0 0
      %1448 = vmatpush1.bf16.msra.mxu0 0
      %1449 = vmatprep.subr.bf16.mxu0 0
      %1450 = vmatpush1.bf16.msra.mxu0 0
      %1451 = vmatprep.subr.bf16.mxu0 0
      %1452 = vmatpush1.bf16.msra.mxu0 0
      %1453 = vmatprep.subr.bf16.mxu0 0
      %1454 = vmatpush1.bf16.msra.mxu0 0
      %1455 = vmatprep.subr.bf16.mxu0 0
      %1456 = vmatpush1.bf16.msra.mxu0 0
      %1457 = vmatprep.subr.bf16.mxu0 0
      %1458 = vmatpush1.bf16.msra.mxu0 0
      %1459 = vmatprep.mubr.bf16.mxu0 %v1422
      %1460 = vmatmul.mubr.bf16.gmra.mrb[0].mxu0 %v1415
      %v1461 = vpop.f32.mrb[0].mxu0
      %v1462 = vadd.f32 %v1386, %v1461
      %v1463 = vpop.f32.mrb[0].mxu0
      %v1464 = vpop.f32.mrb[0].mxu0
      %v1465 = vadd.f32 %v1391, %v1464
      %v1466 = vpop.f32.mrb[0].mxu0
      %1467 = vmatprep.mubr.bf16.mxu0 %v1425
      %1468 = vmatmul.mubr.bf16.gmra.mrb[0].mxu0 %v1417
      %v1469 = vpop.f32.mrb[0].mxu0
      %v1470 = vadd.f32 %v1396, %v1469
      %v1471 = vpop.f32.mrb[0].mxu0
      %v1472 = vpop.f32.mrb[0].mxu0
      %v1473 = vadd.f32 %v1401, %v1472
      %v1474 = vpop.f32.mrb[0].mxu0
      %1475 = vdwg.mxu0
      %v1476 = vmax.f32 %v1462, 0.0
      %v1477 = vmax.f32 %v1465, 0.0
      %v1478 = vmax.f32 %v1470, 0.0
      %v1479 = vmax.f32 %v1473, 0.0
      %v1480 = vadd.f32 %v1476, %v972
      %v1481 = vadd.f32 %v1477, %v973
      %v1482 = vadd.f32 %v1478, %v974
      %v1483 = vadd.f32 %v1479, %v975
      %v1484 = vmax.f32 %v1480, 0.0
      %v1485 = vmax.f32 %v1481, 0.0
      %v1486 = vmax.f32 %v1482, 0.0
      %v1487 = vmax.f32 %v1483, 0.0
      %1488 = vst [vmem:[%s332] sm:$0xff] %v1484
      %1489 = vst [vmem:[%s332 + $0x8] sm:$0xff] %v1485
      %1490 = vst [vmem:[%s332 + $0x10] sm:$0xff] %v1486
      %1491 = vst [vmem:[%s332 + $0x18] sm:$0xff] %v1487
      %p1492 = scmp.lt.s32.totalorder %s20, 1
      %s1493 = scalar_select %p1492, %s20, 1
      %s1494 = smul.addr %s1493, 4
      %s1495 = smul.addr %s1494, 8
      %s1496 = scalar_lea.vmem %s9, %s1495
      // Predicated region
      $region57: #{_tcn_forward.1} parent=55 // pred_check
        %p1497 = pneg %p232
      $region58: #{_tcn_forward.1} parent=55 // pred_check_branch
        %1499 = sbr.rel (%p1497) target = $region60
      $region59: #{_tcn_forward.1} parent=55 // pred_region
        _
      $region60: #{_tcn_forward.1} parent=55 // pred_fallthru
        _
    $region56: #{_tcn_forward.1} parent=5 // pred_fallthru
      _
    %p1500 = scmp.le.s32.totalorder 2, %s15
    // Predicated region
    $region61: #{_tcn_forward.1} parent=5 // pred_check
      %p1501 = pneg %p1500
    $region62: #{_tcn_forward.1} parent=5 // pred_check_branch
      %1503 = sbr.rel (%p1501) target = $region64
    $region63: #{_tcn_forward.1} parent=5 // pred_region
      %s1504 = ssub.s32 %s15, 2
      // Predicated region
      $region65: #{_tcn_forward.1} parent=63 // pred_check
        %p1505 = pneg %p238
      $region66: #{_tcn_forward.1} parent=63 // pred_check_branch
        %1507 = sbr.rel (%p1505) target = $region68
      $region67: #{_tcn_forward.1} parent=63 // pred_region
        %p1508 = scmp.lt.s32.totalorder %s21, 1
        %s1509 = scalar_select %p1508, %s21, 1
        %s1510 = smul.addr %s1509, 4
        %s1511 = smul.addr %s1510, 8
        %s1512 = scalar_lea.vmem %s9, %s1511
      $region68: #{_tcn_forward.1} parent=63 // pred_fallthru
        _
    $region64: #{_tcn_forward.1} parent=5 // pred_fallthru
      _
  $region6: #{_tcn_forward.1} parent=0 // loop_footer
    %s19 = sadd.s32 1, %s15
  $region7: #{_tcn_forward.1} parent=0 // loop_footer_branch
    %14 = sbr.rel target = $region3
  $region8: #{_tcn_forward.1} parent=0 // loop_exit
    _

</llo_original>
